<compile_context>
chip_gen: v6e
topology: v6e:2x2x1
jax: 0.10.0
libtpu: 0.0.40
codegen_flags: <defaults>
</compile_context>

<pallas_src>
import jax
import jax.numpy as jnp
from jax.experimental import pallas as pl
from jax.experimental.pallas import tpu as pltpu

# ----------------------------------------------------------------------------
# Sizes (small, consistent with the module's forward pass)
# ----------------------------------------------------------------------------
N = 2             # image batch.  TODO(synk): original RNNDecoder hardcodes batch_size=3 (bug); use image batch.
C_IN = 128        # fixed by nn.Conv2d(128, 64, 3)
C_OUT = 64        # == attention channel_size
H_IMG = W_IMG = 8
KH = KW = 3
H_FEAT = H_IMG - KH + 1          # 6  (img_J_size / "height")
W_FEAT = W_IMG - KW + 1          # 6  (img_I_size / "width")
P = H_FEAT * W_FEAT              # 36 flattened feature positions
K2C = KH * KW * C_IN             # im2col contraction size (1152)

HID = 32          # LSTM hidden size == decoder_hidden_size
EMB = 32          # decoder input size (== HID so x_t = prev_char + projected u_t broadcasts cleanly)
ATT = 32          # attn_hidden_size
VOCAB = 16        # output_vocab_size
T_STEPS = 5       # unroll_steps
# TODO(synk): num_layers=1 implemented; original allows multi-layer LSTM with dropout.


# ----------------------------------------------------------------------------
# Kernel 1: conv (im2col matmul) + attention feature projection, per image.
#   patches (1, P, KH*KW*Cin), w (KH*KW*Cin, Cout), b (1, Cout),
#   wf1_t (Cout, ATT), pos_bias (P, ATT)
#   -> img (1, P, Cout), feat (1, P, ATT)
# ----------------------------------------------------------------------------
def encode_kernel(p_ref, w_ref, b_ref, wf1_ref, posb_ref, img_ref, feat_ref):
    img = (jnp.dot(p_ref[0], w_ref[...], preferred_element_type=jnp.float32)
           + b_ref[...])                                                    # (P, Cout)
    img_ref[0] = img
    feat_ref[0] = (jnp.dot(img, wf1_ref[...], preferred_element_type=jnp.float32)
                   + posb_ref[...])                                         # (P, ATT)


def encode(patches, w_flat, b, wf1_t, pos_bias):
    n = patches.shape[0]
    const2 = lambda i: (0, 0)
    return pl.pallas_call(
        encode_kernel,
        out_shape=(jax.ShapeDtypeStruct((n, P, C_OUT), jnp.float32),
                   jax.ShapeDtypeStruct((n, P, ATT), jnp.float32)),
        grid=(n,),
        in_specs=[
            pl.BlockSpec((1, P, K2C), lambda i: (i, 0, 0)),
            pl.BlockSpec((K2C, C_OUT), const2),
            pl.BlockSpec((1, C_OUT), const2),
            pl.BlockSpec((C_OUT, ATT), const2),
            pl.BlockSpec((P, ATT), const2),
        ],
        out_specs=(pl.BlockSpec((1, P, C_OUT), lambda i: (i, 0, 0)),
                   pl.BlockSpec((1, P, ATT), lambda i: (i, 0, 0))),
        compiler_params=pltpu.CompilerParams(dimension_semantics=("parallel",)),
    )(patches, w_flat, b.reshape(1, -1), wf1_t, pos_bias)


# ----------------------------------------------------------------------------
# Kernel 2: fused decoder — all T steps in one pallas_call.
#   grid=(T,), "arbitrary"; h/c/u_feed carried in VMEM scratch; weights,
#   feat2d (B*P, ATT), img2d (B*P, C) and the batch-selector one-hot are
#   VMEM-resident across the whole loop.  Per step it writes log_probs
#   directly (log_softmax fused).
# ----------------------------------------------------------------------------
def decoder_kernel(trg_ref, feat_ref, img_ref, sel_ref,
                   wlstm_ref, blstm_ref, ws_ref, va_ref,
                   wuf_ref, buf_ref, wuo_ref, buo_ref, wo_ref, bwo_ref,
                   out_ref, h_scr, c_scr, uf_scr):
    t = pl.program_id(0)

    # TODO(synk): original reads undefined `prev_hidden` at t=0; zero-init LSTM state used.
    @pl.when(t == 0)
    def _():
        h_scr[...] = jnp.zeros_like(h_scr)
        c_scr[...] = jnp.zeros_like(c_scr)
        uf_scr[...] = jnp.zeros_like(uf_scr)

    h = h_scr[...]
    c = c_scr[...]
    hid = h.shape[-1]

    # --- LSTM cell (PyTorch gate order i, f, g, o); single [x,h] @ [Wih;Whh] matmul ---
    x = trg_ref[0] + uf_scr[...]                                   # prev_character + fed context (broadcast)
    xh = jnp.concatenate([x, h], axis=-1)                          # (B, EMB+HID)
    gates = (jnp.dot(xh, wlstm_ref[...], preferred_element_type=jnp.float32)
             + blstm_ref[...])                                     # (B, 4*HID)
    i_g = jax.nn.sigmoid(gates[:, 0 * hid:1 * hid])
    f_g = jax.nn.sigmoid(gates[:, 1 * hid:2 * hid])
    g_g = jnp.tanh(gates[:, 2 * hid:3 * hid])
    o_g = jax.nn.sigmoid(gates[:, 3 * hid:4 * hid])
    c_new = f_g * c + i_g * g_g
    h_new = o_g * jnp.tanh(c_new)
    h_scr[...] = h_new
    c_scr[...] = c_new

    # --- OneHot2DAttention: softmax over the flattened (B*P) scores, as in F.softmax(view(-1)) ---
    s_proj = jnp.dot(h_new, ws_ref[...], preferred_element_type=jnp.float32)   # (B, ATT) == Ws(s_t)
    srep = jnp.dot(sel_ref[...], s_proj, preferred_element_type=jnp.float32)   # (B*P, ATT) batch-broadcast via MXU
    e8 = jnp.tanh(srep + feat_ref[...])                                        # (B*P, ATT)
    scores = jnp.dot(e8, va_ref[...], preferred_element_type=jnp.float32)      # (B*P, 1)  == Va(.)
    m = jnp.max(scores, keepdims=True)
    ex = jnp.exp(scores - m)
    denom = jnp.sum(ex, keepdims=True)
    attn = ex * pl.reciprocal(denom, approx=True)                              # (B*P, 1)
    u = jnp.sum(attn * img_ref[...], axis=0, keepdims=True)                    # (1, C)  == u_t

    # --- output projections ---
    # TODO(synk): original overwrites Wu_1 and never defines Wu_2; split into feed/out projections.
    u_feed = jnp.dot(u, wuf_ref[...], preferred_element_type=jnp.float32) + buf_ref[...]   # (1, EMB)
    u_out = jnp.dot(u, wuo_ref[...], preferred_element_type=jnp.float32) + buo_ref[...]    # (1, V)
    logits = (jnp.dot(h_new, wo_ref[...], preferred_element_type=jnp.float32)
              + bwo_ref[...] + u_out)                                                      # (B, V)
    uf_scr[...] = u_feed

    # fused log_softmax over vocab
    lm = jnp.max(logits, axis=-1, keepdims=True)
    ls = logits - lm
    out_ref[0] = ls - jnp.log(jnp.sum(jnp.exp(ls), axis=-1, keepdims=True))


def decode(trg_tbe, feat2d, img2d, sel, p):
    b = sel.shape[1]
    const2 = lambda t: (0, 0)
    args = (trg_tbe, feat2d, img2d, sel,
            p["w_lstm"], p["b_lstm"], p["ws_t"], p["va_t"],
            p["wuf_t"], p["b_uf"], p["wuo_t"], p["b_uo"], p["wo_t"], p["b_wo"])
    in_specs = [pl.BlockSpec((1, b, EMB), lambda t: (t, 0, 0))]
    in_specs += [pl.BlockSpec(a.shape, const2) for a in args[1:]]   # resident: index ignores t
    return pl.pallas_call(
        decoder_kernel,
        out_shape=jax.ShapeDtypeStruct((T_STEPS, b, VOCAB), jnp.float32),
        grid=(T_STEPS,),
        in_specs=in_specs,
        out_specs=pl.BlockSpec((1, b, VOCAB), lambda t: (t, 0, 0)),
        scratch_shapes=[pltpu.VMEM((b, HID), jnp.float32),
                        pltpu.VMEM((b, HID), jnp.float32),
                        pltpu.VMEM((1, EMB), jnp.float32)],
        compiler_params=pltpu.CompilerParams(dimension_semantics=("arbitrary",)),
    )(*args)


# ----------------------------------------------------------------------------
# Deterministic parameter init (PyTorch-style uniform(+-1/sqrt(fan_in)))
# ----------------------------------------------------------------------------
def _uniform(key, shape, fan_in):
    bound = 1.0 / (float(fan_in) ** 0.5)
    return jax.random.uniform(key, shape, jnp.float32, -bound, bound)


def init_params(key):
    ks = iter(jax.random.split(key, 24))
    p = {}
    # CNNEncoder: Conv2d(128, 64, 3) — PyTorch weight (Cout, Cin, KH, KW) -> im2col (KH*KW*Cin, Cout)
    conv_w = _uniform(next(ks), (C_OUT, C_IN, KH, KW), C_IN * KH * KW)
    p["conv_w_flat"] = jnp.transpose(conv_w, (2, 3, 1, 0)).reshape(K2C, C_OUT)
    p["conv_b"] = _uniform(next(ks), (C_OUT,), C_IN * KH * KW)
    # OneHot2DAttention
    p["ws_t"] = _uniform(next(ks), (ATT, HID), HID).T            # (HID, ATT), no bias
    wf1, b1 = _uniform(next(ks), (ATT, C_OUT), C_OUT), _uniform(next(ks), (ATT,), C_OUT)
    wf2, b2 = _uniform(next(ks), (ATT, W_FEAT), W_FEAT), _uniform(next(ks), (ATT,), W_FEAT)
    wf3, b3 = _uniform(next(ks), (ATT, H_FEAT), H_FEAT), _uniform(next(ks), (ATT,), H_FEAT)
    p["wf1_t"], p["b1"] = wf1.T, b1
    p["wf2_t"], p["b2"] = wf2.T, b2
    p["wf3_t"], p["b3"] = wf3.T, b3
    p["va_t"] = _uniform(next(ks), (1, ATT), ATT).T              # (ATT, 1), Va weight, no bias
    # LSTM (single layer); fuse [Wih; Whh] so gates = [x, h] @ w_lstm
    w_ih = _uniform(next(ks), (4 * HID, EMB), HID)
    w_hh = _uniform(next(ks), (4 * HID, HID), HID)
    b_ih = _uniform(next(ks), (4 * HID,), HID)
    b_hh = _uniform(next(ks), (4 * HID,), HID)
    p["w_lstm"] = jnp.concatenate([w_ih.T, w_hh.T], axis=0)      # (EMB+HID, 4*HID)
    p["b_lstm"] = (b_ih + b_hh).reshape(1, -1)
    # Wu (feed: C->EMB, out: C->VOCAB) and Wo (HID->VOCAB)
    wuf, buf = _uniform(next(ks), (EMB, C_OUT), C_OUT), _uniform(next(ks), (EMB,), C_OUT)
    wuo, buo = _uniform(next(ks), (VOCAB, C_OUT), C_OUT), _uniform(next(ks), (VOCAB,), C_OUT)
    wo, bwo = _uniform(next(ks), (VOCAB, HID), HID), _uniform(next(ks), (VOCAB,), HID)
    p["wuf_t"], p["b_uf"] = wuf.T, buf.reshape(1, -1)
    p["wuo_t"], p["b_uo"] = wuo.T, buo.reshape(1, -1)
    p["wo_t"], p["b_wo"] = wo.T, bwo.reshape(1, -1)
    return p


# ----------------------------------------------------------------------------
# Full Model.forward
# ----------------------------------------------------------------------------
def model_forward(img_nchw, trg_embed, p):
    n = img_nchw.shape[0]
    # Encoder: NCHW -> NHWC, im2col patches (layout plumbing in the wrapper),
    # then one MXU matmul per image inside the Pallas kernel.
    x_nhwc = jnp.transpose(img_nchw, (0, 2, 3, 1))
    cols = [x_nhwc[:, kh:kh + H_FEAT, kw:kw + W_FEAT, :].reshape(n, P, C_IN)
            for kh in range(KH) for kw in range(KW)]
    patches = jnp.concatenate(cols, axis=-1)                          # (N, P, KH*KW*Cin)

    # project_img_features: one-hot position encodings -> time-invariant (P, ATT) bias.
    # TODO(synk): original calls project_img_features with only img_enc; one-hot matrices built here.
    rows = jnp.arange(P) // W_FEAT
    colsi = jnp.arange(P) % W_FEAT
    onehot_h = jax.nn.one_hot(colsi, W_FEAT, dtype=jnp.float32)       # (P, width)
    onehot_v = jax.nn.one_hot(rows, H_FEAT, dtype=jnp.float32)        # (P, height)
    pos_bias = (p["b1"][None, :]
                + onehot_h @ p["wf2_t"] + p["b2"][None, :]
                + onehot_v @ p["wf3_t"] + p["b3"][None, :])           # (P, ATT)

    img_flat, feat_proj = encode(patches, p["conv_w_flat"], p["conv_b"],
                                 p["wf1_t"], pos_bias)                # (N,P,C), (N,P,ATT)
    img2d = img_flat.reshape(n * P, C_OUT)                            # row order = b*P + (i*W_FEAT + j)
    feat2d = feat_proj.reshape(n * P, ATT)
    sel = jnp.repeat(jnp.eye(n, dtype=jnp.float32), P, axis=0)        # (N*P, N) batch one-hot selector

    trg_tbe = jnp.transpose(trg_embed, (1, 0, 2))                     # (T, N, EMB), lane-dense per step

    log_probs_tbv = decode(trg_tbe, feat2d, img2d, sel, p)            # (T, N, V) already log_softmax'd
    log_probs = jnp.transpose(log_probs_tbv, (1, 0, 2))               # (N, T, V)
    preds = jnp.argmax(log_probs, axis=-1)
    return log_probs, preds


if __name__ == "__main__":
    key = jax.random.PRNGKey(0)
    k_img, k_emb, k_par = jax.random.split(key, 3)
    img = jax.random.normal(k_img, (N, C_IN, H_IMG, W_IMG), jnp.float32)
    trg_embed = jax.random.normal(k_emb, (N, T_STEPS, EMB), jnp.float32)
    params = init_params(k_par)

    fwd = jax.jit(model_forward)
    scores, preds = fwd(img, trg_embed, params)
    jax.block_until_ready(scores)
    assert scores.shape == (N, T_STEPS, VOCAB)
    assert preds.shape == (N, T_STEPS)
    print("KERNEL_OK")
</pallas_src>

<mosaic_0001>
module attributes {stable_mosaic.version = 11 : i64} {
  func.func @encode_kernel(%arg0: i32, %arg1: memref<1x36x1152xf32, #tpu.memory_space<vmem>>, %arg2: memref<1152x64xf32, #tpu.memory_space<vmem>>, %arg3: memref<1x64xf32, #tpu.memory_space<vmem>>, %arg4: memref<64x32xf32, #tpu.memory_space<vmem>>, %arg5: memref<36x32xf32, #tpu.memory_space<vmem>>, %arg6: memref<1x36x64xf32, #tpu.memory_space<vmem>>, %arg7: memref<1x36x32xf32, #tpu.memory_space<vmem>>) attributes {dimension_semantics = [#tpu.dimension_semantics<parallel>], iteration_bounds = array<i64: 2>, scalar_prefetch = 0 : i64, scratch_operands = 0 : i64, tpu.core_type = #tpu.core_type<tc>, window_params = [{transform_indices = @transform_0, window_bounds = array<i64: 1, 36, 1152>}, {pipeline_mode = #tpu.pipeline_mode<synchronous>, transform_indices = @transform_1, window_bounds = array<i64: 1152, 64>}, {pipeline_mode = #tpu.pipeline_mode<synchronous>, transform_indices = @transform_2, window_bounds = array<i64: 1, 64>}, {pipeline_mode = #tpu.pipeline_mode<synchronous>, transform_indices = @transform_3, window_bounds = array<i64: 64, 32>}, {pipeline_mode = #tpu.pipeline_mode<synchronous>, transform_indices = @transform_4, window_bounds = array<i64: 36, 32>}, {transform_indices = @transform_5, window_bounds = array<i64: 1, 36, 64>}, {transform_indices = @transform_6, window_bounds = array<i64: 1, 36, 32>}]} {
    %c0 = arith.constant 0 : index
    %c0_0 = arith.constant 0 : index
    %c0_1 = arith.constant 0 : index
    %0 = vector.load %arg1[%c0, %c0_0, %c0_1] : memref<1x36x1152xf32, #tpu.memory_space<vmem>>, vector<1x36x1152xf32>
    %1 = vector.shape_cast %0 : vector<1x36x1152xf32> to vector<36x1152xf32>
    %c0_2 = arith.constant 0 : index
    %c0_3 = arith.constant 0 : index
    %2 = vector.load %arg2[%c0_2, %c0_3] : memref<1152x64xf32, #tpu.memory_space<vmem>>, vector<1152x64xf32>
    %cst = arith.constant dense<0.000000e+00> : vector<36x64xf32>
    %3 = tpu.matmul %1, %2, %cst {dimension_numbers = #tpu.dot_dimension_numbers<[1], [0], [0], [1], [0, 0, 1, 1], [], []>} : vector<36x1152xf32>, vector<1152x64xf32>, vector<36x64xf32> -> vector<36x64xf32>
    %c0_4 = arith.constant 0 : index
    %c0_5 = arith.constant 0 : index
    %4 = vector.load %arg3[%c0_4, %c0_5] : memref<1x64xf32, #tpu.memory_space<vmem>>, vector<1x64xf32>
    %5 = vector.broadcast %4 : vector<1x64xf32> to vector<36x64xf32>
    %6 = arith.addf %3, %5 : vector<36x64xf32>
    %c0_6 = arith.constant 0 : index
    %c0_7 = arith.constant 0 : index
    %c0_8 = arith.constant 0 : index
    %7 = vector.load %arg6[%c0_6, %c0_7, %c0_8] : memref<1x36x64xf32, #tpu.memory_space<vmem>>, vector<1x36x64xf32>
    %8 = vector.shape_cast %7 : vector<1x36x64xf32> to vector<36x64xf32>
    %9 = vector.shape_cast %6 : vector<36x64xf32> to vector<1x36x64xf32>
    tpu.vector_store %arg6[%c0_6, %c0_7, %c0_8], %9 {strides = array<i32>} : memref<1x36x64xf32, #tpu.memory_space<vmem>>, vector<1x36x64xf32>,
    %c0_9 = arith.constant 0 : index
    %c0_10 = arith.constant 0 : index
    %10 = vector.load %arg4[%c0_9, %c0_10] : memref<64x32xf32, #tpu.memory_space<vmem>>, vector<64x32xf32>
    %cst_11 = arith.constant dense<0.000000e+00> : vector<36x32xf32>
    %11 = tpu.matmul %6, %10, %cst_11 {dimension_numbers = #tpu.dot_dimension_numbers<[1], [0], [0], [1], [0, 0, 1, 1], [], []>} : vector<36x64xf32>, vector<64x32xf32>, vector<36x32xf32> -> vector<36x32xf32>
    %c0_12 = arith.constant 0 : index
    %c0_13 = arith.constant 0 : index
    %12 = vector.load %arg5[%c0_12, %c0_13] : memref<36x32xf32, #tpu.memory_space<vmem>>, vector<36x32xf32>
    %13 = arith.addf %11, %12 : vector<36x32xf32>
    %c0_14 = arith.constant 0 : index
    %c0_15 = arith.constant 0 : index
    %c0_16 = arith.constant 0 : index
    %14 = vector.load %arg7[%c0_14, %c0_15, %c0_16] : memref<1x36x32xf32, #tpu.memory_space<vmem>>, vector<1x36x32xf32>
    %15 = vector.shape_cast %14 : vector<1x36x32xf32> to vector<36x32xf32>
    %16 = vector.shape_cast %13 : vector<36x32xf32> to vector<1x36x32xf32>
    tpu.vector_store %arg7[%c0_14, %c0_15, %c0_16], %16 {strides = array<i32>} : memref<1x36x32xf32, #tpu.memory_space<vmem>>, vector<1x36x32xf32>,
    return
  }
  func.func @transform_0(%arg0: i32) -> (i32, i32, i32) {
    %c0_i32 = arith.constant 0 : i32
    %c0_i32_0 = arith.constant 0 : i32
    %c0_i32_1 = arith.constant 0 : i32
    return %arg0, %c0_i32, %c0_i32_0 : i32, i32, i32
  }
  func.func @transform_1(%arg0: i32) -> (i32, i32) {
    %c0_i32 = arith.constant 0 : i32
    %c0_i32_0 = arith.constant 0 : i32
    %c0_i32_1 = arith.constant 0 : i32
    return %c0_i32, %c0_i32_0 : i32, i32
  }
  func.func @transform_2(%arg0: i32) -> (i32, i32) {
    %c0_i32 = arith.constant 0 : i32
    %c0_i32_0 = arith.constant 0 : i32
    %c0_i32_1 = arith.constant 0 : i32
    return %c0_i32, %c0_i32_0 : i32, i32
  }
  func.func @transform_3(%arg0: i32) -> (i32, i32) {
    %c0_i32 = arith.constant 0 : i32
    %c0_i32_0 = arith.constant 0 : i32
    %c0_i32_1 = arith.constant 0 : i32
    return %c0_i32, %c0_i32_0 : i32, i32
  }
  func.func @transform_4(%arg0: i32) -> (i32, i32) {
    %c0_i32 = arith.constant 0 : i32
    %c0_i32_0 = arith.constant 0 : i32
    %c0_i32_1 = arith.constant 0 : i32
    return %c0_i32, %c0_i32_0 : i32, i32
  }
  func.func @transform_5(%arg0: i32) -> (i32, i32, i32) {
    %c0_i32 = arith.constant 0 : i32
    %c0_i32_0 = arith.constant 0 : i32
    %c0_i32_1 = arith.constant 0 : i32
    return %arg0, %c0_i32, %c0_i32_0 : i32, i32, i32
  }
  func.func @transform_6(%arg0: i32) -> (i32, i32, i32) {
    %c0_i32 = arith.constant 0 : i32
    %c0_i32_0 = arith.constant 0 : i32
    %c0_i32_1 = arith.constant 0 : i32
    return %arg0, %c0_i32, %c0_i32_0 : i32, i32, i32
  }
}

module attributes {stable_mosaic.version = 11 : i64} {
  func.func @decoder_kernel(%arg0: i32, %arg1: memref<1x2x32xf32, #tpu.memory_space<vmem>>, %arg2: memref<72x32xf32, #tpu.memory_space<vmem>>, %arg3: memref<72x64xf32, #tpu.memory_space<vmem>>, %arg4: memref<72x2xf32, #tpu.memory_space<vmem>>, %arg5: memref<64x128xf32, #tpu.memory_space<vmem>>, %arg6: memref<1x128xf32, #tpu.memory_space<vmem>>, %arg7: memref<32x32xf32, #tpu.memory_space<vmem>>, %arg8: memref<32x1xf32, #tpu.memory_space<vmem>>, %arg9: memref<64x32xf32, #tpu.memory_space<vmem>>, %arg10: memref<1x32xf32, #tpu.memory_space<vmem>>, %arg11: memref<64x16xf32, #tpu.memory_space<vmem>>, %arg12: memref<1x16xf32, #tpu.memory_space<vmem>>, %arg13: memref<32x16xf32, #tpu.memory_space<vmem>>, %arg14: memref<1x16xf32, #tpu.memory_space<vmem>>, %arg15: memref<1x2x16xf32, #tpu.memory_space<vmem>>, %arg16: memref<2x32xf32, #tpu.memory_space<vmem>>, %arg17: memref<2x32xf32, #tpu.memory_space<vmem>>, %arg18: memref<1x32xf32, #tpu.memory_space<vmem>>) attributes {dimension_semantics = [#tpu.dimension_semantics<arbitrary>], iteration_bounds = array<i64: 5>, scalar_prefetch = 0 : i64, scratch_operands = 3 : i64, tpu.core_type = #tpu.core_type<tc>, window_params = [{transform_indices = @transform_0, window_bounds = array<i64: 1, 2, 32>}, {pipeline_mode = #tpu.pipeline_mode<synchronous>, transform_indices = @transform_1, window_bounds = array<i64: 72, 32>}, {pipeline_mode = #tpu.pipeline_mode<synchronous>, transform_indices = @transform_2, window_bounds = array<i64: 72, 64>}, {pipeline_mode = #tpu.pipeline_mode<synchronous>, transform_indices = @transform_3, window_bounds = array<i64: 72, 2>}, {pipeline_mode = #tpu.pipeline_mode<synchronous>, transform_indices = @transform_4, window_bounds = array<i64: 64, 128>}, {pipeline_mode = #tpu.pipeline_mode<synchronous>, transform_indices = @transform_5, window_bounds = array<i64: 1, 128>}, {pipeline_mode = #tpu.pipeline_mode<synchronous>, transform_indices = @transform_6, window_bounds = array<i64: 32, 32>}, {pipeline_mode = #tpu.pipeline_mode<synchronous>, transform_indices = @transform_7, window_bounds = array<i64: 32, 1>}, {pipeline_mode = #tpu.pipeline_mode<synchronous>, transform_indices = @transform_8, window_bounds = array<i64: 64, 32>}, {pipeline_mode = #tpu.pipeline_mode<synchronous>, transform_indices = @transform_9, window_bounds = array<i64: 1, 32>}, {pipeline_mode = #tpu.pipeline_mode<synchronous>, transform_indices = @transform_10, window_bounds = array<i64: 64, 16>}, {pipeline_mode = #tpu.pipeline_mode<synchronous>, transform_indices = @transform_11, window_bounds = array<i64: 1, 16>}, {pipeline_mode = #tpu.pipeline_mode<synchronous>, transform_indices = @transform_12, window_bounds = array<i64: 32, 16>}, {pipeline_mode = #tpu.pipeline_mode<synchronous>, transform_indices = @transform_13, window_bounds = array<i64: 1, 16>}, {transform_indices = @transform_14, window_bounds = array<i64: 1, 2, 16>}]} {
    %c0_i32 = arith.constant 0 : i32
    %0 = arith.cmpi eq, %arg0, %c0_i32 : i32
    %1 = arith.extui %0 : i1 to i32
    %c0_i32_0 = arith.constant 0 : i32
    %2 = arith.cmpi ne, %1, %c0_i32_0 : i32
    scf.if %2 {
      %cst_58 = arith.constant 0.000000e+00 : f32
      %102 = vector.broadcast %cst_58 : f32 to vector<2x32xf32>
      %c0_59 = arith.constant 0 : index
      %c0_60 = arith.constant 0 : index
      %103 = vector.load %arg16[%c0_59, %c0_60] : memref<2x32xf32, #tpu.memory_space<vmem>>, vector<2x32xf32>
      tpu.vector_store %arg16[%c0_59, %c0_60], %102 {strides = array<i32>} : memref<2x32xf32, #tpu.memory_space<vmem>>, vector<2x32xf32>,
      %cst_61 = arith.constant 0.000000e+00 : f32
      %104 = vector.broadcast %cst_61 : f32 to vector<2x32xf32>
      %c0_62 = arith.constant 0 : index
      %c0_63 = arith.constant 0 : index
      %105 = vector.load %arg17[%c0_62, %c0_63] : memref<2x32xf32, #tpu.memory_space<vmem>>, vector<2x32xf32>
      tpu.vector_store %arg17[%c0_62, %c0_63], %104 {strides = array<i32>} : memref<2x32xf32, #tpu.memory_space<vmem>>, vector<2x32xf32>,
      %cst_64 = arith.constant 0.000000e+00 : f32
      %106 = vector.broadcast %cst_64 : f32 to vector<1x32xf32>
      %c0_65 = arith.constant 0 : index
      %c0_66 = arith.constant 0 : index
      %107 = vector.load %arg18[%c0_65, %c0_66] : memref<1x32xf32, #tpu.memory_space<vmem>>, vector<1x32xf32>
      tpu.vector_store %arg18[%c0_65, %c0_66], %106 {strides = array<i32>} : memref<1x32xf32, #tpu.memory_space<vmem>>, vector<1x32xf32>,
    } else {
    }
    %c0 = arith.constant 0 : index
    %c0_1 = arith.constant 0 : index
    %3 = vector.load %arg16[%c0, %c0_1] : memref<2x32xf32, #tpu.memory_space<vmem>>, vector<2x32xf32>
    %c0_2 = arith.constant 0 : index
    %c0_3 = arith.constant 0 : index
    %4 = vector.load %arg17[%c0_2, %c0_3] : memref<2x32xf32, #tpu.memory_space<vmem>>, vector<2x32xf32>
    %c0_4 = arith.constant 0 : index
    %c0_5 = arith.constant 0 : index
    %c0_6 = arith.constant 0 : index
    %5 = vector.load %arg1[%c0_4, %c0_5, %c0_6] : memref<1x2x32xf32, #tpu.memory_space<vmem>>, vector<1x2x32xf32>
    %6 = vector.shape_cast %5 : vector<1x2x32xf32> to vector<2x32xf32>
    %c0_7 = arith.constant 0 : index
    %c0_8 = arith.constant 0 : index
    %7 = vector.load %arg18[%c0_7, %c0_8] : memref<1x32xf32, #tpu.memory_space<vmem>>, vector<1x32xf32>
    %8 = vector.broadcast %7 : vector<1x32xf32> to vector<2x32xf32>
    %9 = arith.addf %6, %8 : vector<2x32xf32>
    %10 = tpu.concatenate %9, %3 in 1 : vector<2x32xf32>, vector<2x32xf32> -> vector<2x64xf32>
    %c0_9 = arith.constant 0 : index
    %c0_10 = arith.constant 0 : index
    %11 = vector.load %arg5[%c0_9, %c0_10] : memref<64x128xf32, #tpu.memory_space<vmem>>, vector<64x128xf32>
    %cst = arith.constant dense<0.000000e+00> : vector<2x128xf32>
    %12 = tpu.matmul %10, %11, %cst {dimension_numbers = #tpu.dot_dimension_numbers<[1], [0], [0], [1], [0, 0, 1, 1], [], []>} : vector<2x64xf32>, vector<64x128xf32>, vector<2x128xf32> -> vector<2x128xf32>
    %c0_11 = arith.constant 0 : index
    %c0_12 = arith.constant 0 : index
    %13 = vector.load %arg6[%c0_11, %c0_12] : memref<1x128xf32, #tpu.memory_space<vmem>>, vector<1x128xf32>
    %14 = vector.broadcast %13 : vector<1x128xf32> to vector<2x128xf32>
    %15 = arith.addf %12, %14 : vector<2x128xf32>
    %16 = vector.extract_strided_slice %15 {offsets = [0, 0], sizes = [2, 32], strides = [1, 1]} : vector<2x128xf32> to vector<2x32xf32>
    %17 = arith.negf %16 : vector<2x32xf32>
    %18 = math.exp %17 : vector<2x32xf32>
    %cst_13 = arith.constant 1.000000e+00 : f32
    %19 = vector.broadcast %cst_13 : f32 to vector<2x32xf32>
    %20 = arith.addf %19, %18 : vector<2x32xf32>
    %21 = arith.divf %19, %20 : vector<2x32xf32>
    %22 = vector.extract_strided_slice %15 {offsets = [0, 32], sizes = [2, 32], strides = [1, 1]} : vector<2x128xf32> to vector<2x32xf32>
    %23 = arith.negf %22 : vector<2x32xf32>
    %24 = math.exp %23 : vector<2x32xf32>
    %cst_14 = arith.constant 1.000000e+00 : f32
    %25 = vector.broadcast %cst_14 : f32 to vector<2x32xf32>
    %26 = arith.addf %25, %24 : vector<2x32xf32>
    %27 = arith.divf %25, %26 : vector<2x32xf32>
    %28 = vector.extract_strided_slice %15 {offsets = [0, 64], sizes = [2, 32], strides = [1, 1]} : vector<2x128xf32> to vector<2x32xf32>
    %29 = math.tanh %28 : vector<2x32xf32>
    %30 = vector.extract_strided_slice %15 {offsets = [0, 96], sizes = [2, 32], strides = [1, 1]} : vector<2x128xf32> to vector<2x32xf32>
    %31 = arith.negf %30 : vector<2x32xf32>
    %32 = math.exp %31 : vector<2x32xf32>
    %cst_15 = arith.constant 1.000000e+00 : f32
    %33 = vector.broadcast %cst_15 : f32 to vector<2x32xf32>
    %34 = arith.addf %33, %32 : vector<2x32xf32>
    %35 = arith.divf %33, %34 : vector<2x32xf32>
    %36 = arith.mulf %27, %4 : vector<2x32xf32>
    %37 = arith.mulf %21, %29 : vector<2x32xf32>
    %38 = arith.addf %36, %37 : vector<2x32xf32>
    %39 = math.tanh %38 : vector<2x32xf32>
    %40 = arith.mulf %35, %39 : vector<2x32xf32>
    %c0_16 = arith.constant 0 : index
    %c0_17 = arith.constant 0 : index
    %41 = vector.load %arg16[%c0_16, %c0_17] : memref<2x32xf32, #tpu.memory_space<vmem>>, vector<2x32xf32>
    tpu.vector_store %arg16[%c0_16, %c0_17], %40 {strides = array<i32>} : memref<2x32xf32, #tpu.memory_space<vmem>>, vector<2x32xf32>,
    %c0_18 = arith.constant 0 : index
    %c0_19 = arith.constant 0 : index
    %42 = vector.load %arg17[%c0_18, %c0_19] : memref<2x32xf32, #tpu.memory_space<vmem>>, vector<2x32xf32>
    tpu.vector_store %arg17[%c0_18, %c0_19], %38 {strides = array<i32>} : memref<2x32xf32, #tpu.memory_space<vmem>>, vector<2x32xf32>,
    %c0_20 = arith.constant 0 : index
    %c0_21 = arith.constant 0 : index
    %43 = vector.load %arg7[%c0_20, %c0_21] : memref<32x32xf32, #tpu.memory_space<vmem>>, vector<32x32xf32>
    %cst_22 = arith.constant dense<0.000000e+00> : vector<2x32xf32>
    %44 = tpu.matmul %40, %43, %cst_22 {dimension_numbers = #tpu.dot_dimension_numbers<[1], [0], [0], [1], [0, 0, 1, 1], [], []>} : vector<2x32xf32>, vector<32x32xf32>, vector<2x32xf32> -> vector<2x32xf32>
    %c0_23 = arith.constant 0 : index
    %c0_24 = arith.constant 0 : index
    %45 = vector.load %arg4[%c0_23, %c0_24] : memref<72x2xf32, #tpu.memory_space<vmem>>, vector<72x2xf32>
    %cst_25 = arith.constant dense<0.000000e+00> : vector<72x32xf32>
    %46 = tpu.matmul %45, %44, %cst_25 {dimension_numbers = #tpu.dot_dimension_numbers<[1], [0], [0], [1], [0, 0, 1, 1], [], []>} : vector<72x2xf32>, vector<2x32xf32>, vector<72x32xf32> -> vector<72x32xf32>
    %c0_26 = arith.constant 0 : index
    %c0_27 = arith.constant 0 : index
    %47 = vector.load %arg2[%c0_26, %c0_27] : memref<72x32xf32, #tpu.memory_space<vmem>>, vector<72x32xf32>
    %48 = arith.addf %46, %47 : vector<72x32xf32>
    %49 = math.tanh %48 : vector<72x32xf32>
    %c0_28 = arith.constant 0 : index
    %c0_29 = arith.constant 0 : index
    %50 = vector.load %arg8[%c0_28, %c0_29] : memref<32x1xf32, #tpu.memory_space<vmem>>, vector<32x1xf32>
    %cst_30 = arith.constant dense<0.000000e+00> : vector<72x1xf32>
    %51 = tpu.matmul %49, %50, %cst_30 {dimension_numbers = #tpu.dot_dimension_numbers<[1], [0], [0], [1], [0, 0, 1, 1], [], []>} : vector<72x32xf32>, vector<32x1xf32>, vector<72x1xf32> -> vector<72x1xf32>
    %52 = vector.shape_cast %51 : vector<72x1xf32> to vector<1x72x1xf32>
    %cst_31 = arith.constant dense<0xFF800000> : vector<1xf32>
    %53 = vector.multi_reduction <maximumf>, %52, %cst_31 [1, 2] : vector<1x72x1xf32> to vector<1xf32>
    %54 = vector.shape_cast %53 : vector<1xf32> to vector<1x1x1xf32>
    %55 = vector.extract %54[0, 0, 0] : f32 from vector<1x1x1xf32>
    %56 = vector.broadcast %55 : f32 to vector<1x1xf32>
    %57 = vector.broadcast %56 : vector<1x1xf32> to vector<72x1xf32>
    %58 = arith.subf %51, %57 : vector<72x1xf32>
    %59 = math.exp %58 : vector<72x1xf32>
    %60 = vector.shape_cast %59 : vector<72x1xf32> to vector<1x72x1xf32>
    %cst_32 = arith.constant dense<0.000000e+00> : vector<1xf32>
    %61 = vector.multi_reduction <add>, %60, %cst_32 [1, 2] : vector<1x72x1xf32> to vector<1xf32>
    %62 = vector.shape_cast %61 : vector<1xf32> to vector<1x1x1xf32>
    %63 = vector.extract %62[0, 0, 0] : f32 from vector<1x1x1xf32>
    %64 = vector.broadcast %63 : f32 to vector<1x1xf32>
    %65 = tpu.reciprocal %64 {approx = true} : vector<1x1xf32> -> vector<1x1xf32>
    %66 = vector.broadcast %65 : vector<1x1xf32> to vector<72x1xf32>
    %67 = arith.mulf %59, %66 : vector<72x1xf32>
    %c0_33 = arith.constant 0 : index
    %c0_34 = arith.constant 0 : index
    %68 = vector.load %arg3[%c0_33, %c0_34] : memref<72x64xf32, #tpu.memory_space<vmem>>, vector<72x64xf32>
    %69 = vector.broadcast %67 : vector<72x1xf32> to vector<72x64xf32>
    %70 = arith.mulf %69, %68 : vector<72x64xf32>
    %cst_35 = arith.constant dense<0.000000e+00> : vector<64xf32>
    %71 = vector.multi_reduction <add>, %70, %cst_35 [0] : vector<72x64xf32> to vector<64xf32>
    %72 = vector.shape_cast %71 : vector<64xf32> to vector<1x64xf32>
    %c0_36 = arith.constant 0 : index
    %c0_37 = arith.constant 0 : index
    %73 = vector.load %arg9[%c0_36, %c0_37] : memref<64x32xf32, #tpu.memory_space<vmem>>, vector<64x32xf32>
    %cst_38 = arith.constant dense<0.000000e+00> : vector<1x32xf32>
    %74 = tpu.matmul %72, %73, %cst_38 {dimension_numbers = #tpu.dot_dimension_numbers<[1], [0], [0], [1], [0, 0, 1, 1], [], []>} : vector<1x64xf32>, vector<64x32xf32>, vector<1x32xf32> -> vector<1x32xf32>
    %c0_39 = arith.constant 0 : index
    %c0_40 = arith.constant 0 : index
    %75 = vector.load %arg10[%c0_39, %c0_40] : memref<1x32xf32, #tpu.memory_space<vmem>>, vector<1x32xf32>
    %76 = arith.addf %74, %75 : vector<1x32xf32>
    %c0_41 = arith.constant 0 : index
    %c0_42 = arith.constant 0 : index
    %77 = vector.load %arg11[%c0_41, %c0_42] : memref<64x16xf32, #tpu.memory_space<vmem>>, vector<64x16xf32>
    %cst_43 = arith.constant dense<0.000000e+00> : vector<1x16xf32>
    %78 = tpu.matmul %72, %77, %cst_43 {dimension_numbers = #tpu.dot_dimension_numbers<[1], [0], [0], [1], [0, 0, 1, 1], [], []>} : vector<1x64xf32>, vector<64x16xf32>, vector<1x16xf32> -> vector<1x16xf32>
    %c0_44 = arith.constant 0 : index
    %c0_45 = arith.constant 0 : index
    %79 = vector.load %arg12[%c0_44, %c0_45] : memref<1x16xf32, #tpu.memory_space<vmem>>, vector<1x16xf32>
    %80 = arith.addf %78, %79 : vector<1x16xf32>
    %c0_46 = arith.constant 0 : index
    %c0_47 = arith.constant 0 : index
    %81 = vector.load %arg13[%c0_46, %c0_47] : memref<32x16xf32, #tpu.memory_space<vmem>>, vector<32x16xf32>
    %cst_48 = arith.constant dense<0.000000e+00> : vector<2x16xf32>
    %82 = tpu.matmul %40, %81, %cst_48 {dimension_numbers = #tpu.dot_dimension_numbers<[1], [0], [0], [1], [0, 0, 1, 1], [], []>} : vector<2x32xf32>, vector<32x16xf32>, vector<2x16xf32> -> vector<2x16xf32>
    %c0_49 = arith.constant 0 : index
    %c0_50 = arith.constant 0 : index
    %83 = vector.load %arg14[%c0_49, %c0_50] : memref<1x16xf32, #tpu.memory_space<vmem>>, vector<1x16xf32>
    %84 = vector.broadcast %83 : vector<1x16xf32> to vector<2x16xf32>
    %85 = arith.addf %82, %84 : vector<2x16xf32>
    %86 = vector.broadcast %80 : vector<1x16xf32> to vector<2x16xf32>
    %87 = arith.addf %85, %86 : vector<2x16xf32>
    %c0_51 = arith.constant 0 : index
    %c0_52 = arith.constant 0 : index
    %88 = vector.load %arg18[%c0_51, %c0_52] : memref<1x32xf32, #tpu.memory_space<vmem>>, vector<1x32xf32>
    tpu.vector_store %arg18[%c0_51, %c0_52], %76 {strides = array<i32>} : memref<1x32xf32, #tpu.memory_space<vmem>>, vector<1x32xf32>,
    %cst_53 = arith.constant dense<0xFF800000> : vector<2xf32>
    %89 = vector.multi_reduction <maximumf>, %87, %cst_53 [1] : vector<2x16xf32> to vector<2xf32>
    %90 = vector.shape_cast %89 : vector<2xf32> to vector<2x1xf32>
    %91 = vector.broadcast %90 : vector<2x1xf32> to vector<2x16xf32>
    %92 = arith.subf %87, %91 : vector<2x16xf32>
    %93 = math.exp %92 : vector<2x16xf32>
    %cst_54 = arith.constant dense<0.000000e+00> : vector<2xf32>
    %94 = vector.multi_reduction <add>, %93, %cst_54 [1] : vector<2x16xf32> to vector<2xf32>
    %95 = vector.shape_cast %94 : vector<2xf32> to vector<2x1xf32>
    %96 = math.log %95 : vector<2x1xf32>
    %97 = vector.broadcast %96 : vector<2x1xf32> to vector<2x16xf32>
    %98 = arith.subf %92, %97 : vector<2x16xf32>
    %c0_55 = arith.constant 0 : index
    %c0_56 = arith.constant 0 : index
    %c0_57 = arith.constant 0 : index
    %99 = vector.load %arg15[%c0_55, %c0_56, %c0_57] : memref<1x2x16xf32, #tpu.memory_space<vmem>>, vector<1x2x16xf32>
    %100 = vector.shape_cast %99 : vector<1x2x16xf32> to vector<2x16xf32>
    %101 = vector.shape_cast %98 : vector<2x16xf32> to vector<1x2x16xf32>
    tpu.vector_store %arg15[%c0_55, %c0_56, %c0_57], %101 {strides = array<i32>} : memref<1x2x16xf32, #tpu.memory_space<vmem>>, vector<1x2x16xf32>,
    return
  }
  func.func @transform_0(%arg0: i32) -> (i32, i32, i32) {
    %c0_i32 = arith.constant 0 : i32
    %c0_i32_0 = arith.constant 0 : i32
    %c0_i32_1 = arith.constant 0 : i32
    return %arg0, %c0_i32, %c0_i32_0 : i32, i32, i32
  }
  func.func @transform_1(%arg0: i32) -> (i32, i32) {
    %c0_i32 = arith.constant 0 : i32
    %c0_i32_0 = arith.constant 0 : i32
    %c0_i32_1 = arith.constant 0 : i32
    return %c0_i32, %c0_i32_0 : i32, i32
  }
  func.func @transform_2(%arg0: i32) -> (i32, i32) {
    %c0_i32 = arith.constant 0 : i32
    %c0_i32_0 = arith.constant 0 : i32
    %c0_i32_1 = arith.constant 0 : i32
    return %c0_i32, %c0_i32_0 : i32, i32
  }
  func.func @transform_3(%arg0: i32) -> (i32, i32) {
    %c0_i32 = arith.constant 0 : i32
    %c0_i32_0 = arith.constant 0 : i32
    %c0_i32_1 = arith.constant 0 : i32
    return %c0_i32, %c0_i32_0 : i32, i32
  }
  func.func @transform_4(%arg0: i32) -> (i32, i32) {
    %c0_i32 = arith.constant 0 : i32
    %c0_i32_0 = arith.constant 0 : i32
    %c0_i32_1 = arith.constant 0 : i32
    return %c0_i32, %c0_i32_0 : i32, i32
  }
  func.func @transform_5(%arg0: i32) -> (i32, i32) {
    %c0_i32 = arith.constant 0 : i32
    %c0_i32_0 = arith.constant 0 : i32
    %c0_i32_1 = arith.constant 0 : i32
    return %c0_i32, %c0_i32_0 : i32, i32
  }
  func.func @transform_6(%arg0: i32) -> (i32, i32) {
    %c0_i32 = arith.constant 0 : i32
    %c0_i32_0 = arith.constant 0 : i32
    %c0_i32_1 = arith.constant 0 : i32
    return %c0_i32, %c0_i32_0 : i32, i32
  }
  func.func @transform_7(%arg0: i32) -> (i32, i32) {
    %c0_i32 = arith.constant 0 : i32
    %c0_i32_0 = arith.constant 0 : i32
    %c0_i32_1 = arith.constant 0 : i32
    return %c0_i32, %c0_i32_0 : i32, i32
  }
  func.func @transform_8(%arg0: i32) -> (i32, i32) {
    %c0_i32 = arith.constant 0 : i32
    %c0_i32_0 = arith.constant 0 : i32
    %c0_i32_1 = arith.constant 0 : i32
    return %c0_i32, %c0_i32_0 : i32, i32
  }
  func.func @transform_9(%arg0: i32) -> (i32, i32) {
    %c0_i32 = arith.constant 0 : i32
    %c0_i32_0 = arith.constant 0 : i32
    %c0_i32_1 = arith.constant 0 : i32
    return %c0_i32, %c0_i32_0 : i32, i32
  }
  func.func @transform_10(%arg0: i32) -> (i32, i32) {
    %c0_i32 = arith.constant 0 : i32
    %c0_i32_0 = arith.constant 0 : i32
    %c0_i32_1 = arith.constant 0 : i32
    return %c0_i32, %c0_i32_0 : i32, i32
  }
  func.func @transform_11(%arg0: i32) -> (i32, i32) {
    %c0_i32 = arith.constant 0 : i32
    %c0_i32_0 = arith.constant 0 : i32
    %c0_i32_1 = arith.constant 0 : i32
    return %c0_i32, %c0_i32_0 : i32, i32
  }
  func.func @transform_12(%arg0: i32) -> (i32, i32) {
    %c0_i32 = arith.constant 0 : i32
    %c0_i32_0 = arith.constant 0 : i32
    %c0_i32_1 = arith.constant 0 : i32
    return %c0_i32, %c0_i32_0 : i32, i32
  }
  func.func @transform_13(%arg0: i32) -> (i32, i32) {
    %c0_i32 = arith.constant 0 : i32
    %c0_i32_0 = arith.constant 0 : i32
    %c0_i32_1 = arith.constant 0 : i32
    return %c0_i32, %c0_i32_0 : i32, i32
  }
  func.func @transform_14(%arg0: i32) -> (i32, i32, i32) {
    %c0_i32 = arith.constant 0 : i32
    %c0_i32_0 = arith.constant 0 : i32
    %c0_i32_1 = arith.constant 0 : i32
    return %arg0, %c0_i32, %c0_i32_0 : i32, i32, i32
  }
}

</mosaic_0001>

<llo_original>
// kernel: model_forward.2
$region0: #{model_forward.2}
  #allocation0 [shape = 'u32[]', space=smem, size = 0x4, offset = 0x4, fixed_abs, tag = 'smem constant byte address 0x4 - core index']
  #allocation1 [shape = 'u32[144,128]{1,0:T(1,128)}', space=vmem, size = 0x12000, scoped, tag = 'internal scratch']
  %s0 = inlined_call_operand.vmem [shape: f32[2,36,1152], index: 0, kind: input, shape index: {}]
  %s1 = inlined_call_operand.vmem [shape: f32[1152,64], index: 1, kind: input, shape index: {}]
  %s2 = inlined_call_operand.vmem [shape: f32[1,64], index: 2, kind: input, shape index: {}]
  %s3 = inlined_call_operand.vmem [shape: f32[64,32], index: 3, kind: input, shape index: {}]
  %s4 = inlined_call_operand.vmem [shape: f32[36,32], index: 4, kind: input, shape index: {}]
  %s5 = inlined_call_operand.vmem [shape: f32[2,36,64], index: 5, kind: output, shape index: {0}]
  %s6 = inlined_call_operand.vmem [shape: f32[2,36,32], index: 6, kind: output, shape index: {1}]
  %7 = xla_tuple %s5, %s6
  %s8 = sld [smem:[#allocation0]]
  $region61: #{model_forward.2} parent=0
    _
  %s10 = ssub.s32 1, %s8
  %s11 = scalar_select 0, %s10, %s8
  loop: start=0, step=1, limit=4
  $region2: #{model_forward.2} parent=0 // loop_pre_header
    _
  $region3: #{model_forward.2} parent=0 // loop_header
    %s13 = sphi 0, %s17
    %p14 = scmp.ge.s32.totalorder %s13, 4
    %s23 = sphi 0, %s25
    %s26 = sphi 0, %s23
    %s27 = sphi 0, %s26
    %s43 = sphi 0, %s27
    %s47 = sphi 0, %s47
    %s49 = sphi 0, %s47
    %s50 = sphi 0, %s49
    %s64 = sphi 0, %s50
    %s68 = sphi 0, %s68
    %s70 = sphi 0, %s68
    %s71 = sphi 0, %s70
    %s85 = sphi 0, %s71
    %s89 = sphi 0, %s89
    %s91 = sphi 0, %s89
    %s92 = sphi 0, %s91
    %s106 = sphi 0, %s92
    %s110 = sphi 0, %s110
    %s112 = sphi 0, %s110
    %s113 = sphi 0, %s112
    %s127 = sphi 0, %s113
    %s133 = sphi 0, %s135
    %s136 = sphi 0, %s133
    %s137 = sphi 0, %s136
    %s153 = sphi 0, %s137
    %s159 = sphi 0, %s161
    %s162 = sphi 0, %s159
    %s163 = sphi 0, %s162
    %s179 = sphi 0, %s163
  $region4: #{model_forward.2} parent=0 // loop_header_branch
    %16 = sbr.rel (%p14) target = $region8
  $region5: #{model_forward.2} parent=0 // loop_body
    %s18 = ssub.s32 %s13, 1
    %s19 = ssub.s32 %s13, 2
    %s20 = sadd.s32 %s13, 1
    %s21 = ssub.s32 %s13, %s20
    %p22 = scmp.eq.s32.totalorder %s21, 0
    %s24 = sadd.s32 %s23, 1
    %s25 = scalar_select %p22, %s23, %s24
    %p28 = pneg %p22
    %p29 = scmp.eq.s32.totalorder %s13, 1
    %p30 = por %p28, %p29
    %p31 = scmp.ne.s32.totalorder %s23, %s26
    %p32 = scmp.eq.s32.totalorder %s13, 0
    %p33 = por %p31, %p32
    %p34 = scmp.ne.s32.totalorder %s23, %s26
    %p35 = scmp.eq.s32.totalorder %s18, 1
    %p36 = por %p34, %p35
    %p37 = scmp.ne.s32.totalorder %s26, %s27
    %p38 = scmp.eq.s32.totalorder %s18, 0
    %p39 = por %p37, %p38
    %p40 = scmp.ne.s32.totalorder %s26, %s27
    %p41 = scmp.eq.s32.totalorder %s19, 1
    %p42 = por %p40, %p41
    %p44 = scmp.ne.s32.totalorder %s27, %s43
    %p45 = scmp.eq.s32.totalorder %s19, 0
    %p46 = por %p44, %p45
    %s48 = sadd.s32 %s47, 1
    %p51 = scmp.eq.s32.totalorder %s13, 1
    %p52 = scmp.ne.s32.totalorder %s47, %s49
    %p53 = scmp.eq.s32.totalorder %s13, 0
    %p54 = por %p52, %p53
    %p55 = scmp.ne.s32.totalorder %s47, %s49
    %p56 = scmp.eq.s32.totalorder %s18, 1
    %p57 = por %p55, %p56
    %p58 = scmp.ne.s32.totalorder %s49, %s50
    %p59 = scmp.eq.s32.totalorder %s18, 0
    %p60 = por %p58, %p59
    %p61 = scmp.ne.s32.totalorder %s49, %s50
    %p62 = scmp.eq.s32.totalorder %s19, 1
    %p63 = por %p61, %p62
    %p65 = scmp.ne.s32.totalorder %s50, %s64
    %p66 = scmp.eq.s32.totalorder %s19, 0
    %p67 = por %p65, %p66
    %s69 = sadd.s32 %s68, 1
    %p72 = scmp.eq.s32.totalorder %s13, 1
    %p73 = scmp.ne.s32.totalorder %s68, %s70
    %p74 = scmp.eq.s32.totalorder %s13, 0
    %p75 = por %p73, %p74
    %p76 = scmp.ne.s32.totalorder %s68, %s70
    %p77 = scmp.eq.s32.totalorder %s18, 1
    %p78 = por %p76, %p77
    %p79 = scmp.ne.s32.totalorder %s70, %s71
    %p80 = scmp.eq.s32.totalorder %s18, 0
    %p81 = por %p79, %p80
    %p82 = scmp.ne.s32.totalorder %s70, %s71
    %p83 = scmp.eq.s32.totalorder %s19, 1
    %p84 = por %p82, %p83
    %p86 = scmp.ne.s32.totalorder %s71, %s85
    %p87 = scmp.eq.s32.totalorder %s19, 0
    %p88 = por %p86, %p87
    %s90 = sadd.s32 %s89, 1
    %p93 = scmp.eq.s32.totalorder %s13, 1
    %p94 = scmp.ne.s32.totalorder %s89, %s91
    %p95 = scmp.eq.s32.totalorder %s13, 0
    %p96 = por %p94, %p95
    %p97 = scmp.ne.s32.totalorder %s89, %s91
    %p98 = scmp.eq.s32.totalorder %s18, 1
    %p99 = por %p97, %p98
    %p100 = scmp.ne.s32.totalorder %s91, %s92
    %p101 = scmp.eq.s32.totalorder %s18, 0
    %p102 = por %p100, %p101
    %p103 = scmp.ne.s32.totalorder %s91, %s92
    %p104 = scmp.eq.s32.totalorder %s19, 1
    %p105 = por %p103, %p104
    %p107 = scmp.ne.s32.totalorder %s92, %s106
    %p108 = scmp.eq.s32.totalorder %s19, 0
    %p109 = por %p107, %p108
    %s111 = sadd.s32 %s110, 1
    %p114 = scmp.eq.s32.totalorder %s13, 1
    %p115 = scmp.ne.s32.totalorder %s110, %s112
    %p116 = scmp.eq.s32.totalorder %s13, 0
    %p117 = por %p115, %p116
    %p118 = scmp.ne.s32.totalorder %s110, %s112
    %p119 = scmp.eq.s32.totalorder %s18, 1
    %p120 = por %p118, %p119
    %p121 = scmp.ne.s32.totalorder %s112, %s113
    %p122 = scmp.eq.s32.totalorder %s18, 0
    %p123 = por %p121, %p122
    %p124 = scmp.ne.s32.totalorder %s112, %s113
    %p125 = scmp.eq.s32.totalorder %s19, 1
    %p126 = por %p124, %p125
    %p128 = scmp.ne.s32.totalorder %s113, %s127
    %p129 = scmp.eq.s32.totalorder %s19, 0
    %p130 = por %p128, %p129
    %s131 = ssub.s32 %s13, %s20
    %p132 = scmp.eq.s32.totalorder %s131, 0
    %s134 = sadd.s32 %s133, 1
    %s135 = scalar_select %p132, %s133, %s134
    %p138 = pneg %p132
    %p139 = scmp.eq.s32.totalorder %s13, 1
    %p140 = por %p138, %p139
    %p141 = scmp.ne.s32.totalorder %s133, %s136
    %p142 = scmp.eq.s32.totalorder %s13, 0
    %p143 = por %p141, %p142
    %p144 = scmp.ne.s32.totalorder %s133, %s136
    %p145 = scmp.eq.s32.totalorder %s18, 1
    %p146 = por %p144, %p145
    %p147 = scmp.ne.s32.totalorder %s136, %s137
    %p148 = scmp.eq.s32.totalorder %s18, 0
    %p149 = por %p147, %p148
    %p150 = scmp.ne.s32.totalorder %s136, %s137
    %p151 = scmp.eq.s32.totalorder %s19, 1
    %p152 = por %p150, %p151
    %p154 = scmp.ne.s32.totalorder %s137, %s153
    %p155 = scmp.eq.s32.totalorder %s19, 0
    %p156 = por %p154, %p155
    %s157 = ssub.s32 %s13, %s20
    %p158 = scmp.eq.s32.totalorder %s157, 0
    %s160 = sadd.s32 %s159, 1
    %s161 = scalar_select %p158, %s159, %s160
    %p164 = pneg %p158
    %p165 = scmp.eq.s32.totalorder %s13, 1
    %p166 = por %p164, %p165
    %p167 = scmp.ne.s32.totalorder %s159, %s162
    %p168 = scmp.eq.s32.totalorder %s13, 0
    %p169 = por %p167, %p168
    %p170 = scmp.ne.s32.totalorder %s159, %s162
    %p171 = scmp.eq.s32.totalorder %s18, 1
    %p172 = por %p170, %p171
    %p173 = scmp.ne.s32.totalorder %s162, %s163
    %p174 = scmp.eq.s32.totalorder %s18, 0
    %p175 = por %p173, %p174
    %p176 = scmp.ne.s32.totalorder %s162, %s163
    %p177 = scmp.eq.s32.totalorder %s19, 1
    %p178 = por %p176, %p177
    %p180 = scmp.ne.s32.totalorder %s163, %s179
    %p181 = scmp.eq.s32.totalorder %s19, 0
    %p182 = por %p180, %p181
    %p183 = scmp.le.s32.totalorder 1, %s13
    %p184 = scmp.lt.s32.totalorder %s13, 3
    %p185 = pnand %p183, %p184
    %p186 = pneg %p185
    // Predicated region
    $region9: #{model_forward.2} parent=5 // pred_check
      _
    $region10: #{model_forward.2} parent=5 // pred_check_branch
      %188 = sbr.rel (%p185) target = $region12
    $region11: #{model_forward.2} parent=5 // pred_region
      %s189 = ssub.s32 %s13, 1
      // Predicated region
      $region13: #{model_forward.2} parent=11 // pred_check
        %p190 = pneg %p60
      $region14: #{model_forward.2} parent=11 // pred_check_branch
        %192 = sbr.rel (%p190) target = $region16
      $region15: #{model_forward.2} parent=11 // pred_region
        _
      $region16: #{model_forward.2} parent=11 // pred_fallthru
        _
      // Predicated region
      $region17: #{model_forward.2} parent=11 // pred_check
        %p193 = pneg %p81
      $region18: #{model_forward.2} parent=11 // pred_check_branch
        %195 = sbr.rel (%p193) target = $region20
      $region19: #{model_forward.2} parent=11 // pred_region
        _
      $region20: #{model_forward.2} parent=11 // pred_fallthru
        _
      // Predicated region
      $region21: #{model_forward.2} parent=11 // pred_check
        %p196 = pneg %p102
      $region22: #{model_forward.2} parent=11 // pred_check_branch
        %198 = sbr.rel (%p196) target = $region24
      $region23: #{model_forward.2} parent=11 // pred_region
        _
      $region24: #{model_forward.2} parent=11 // pred_fallthru
        _
      // Predicated region
      $region25: #{model_forward.2} parent=11 // pred_check
        %p199 = pneg %p123
      $region26: #{model_forward.2} parent=11 // pred_check_branch
        %201 = sbr.rel (%p199) target = $region28
      $region27: #{model_forward.2} parent=11 // pred_region
        _
      $region28: #{model_forward.2} parent=11 // pred_fallthru
        _
    $region12: #{model_forward.2} parent=5 // pred_fallthru
      _
    %p202 = scmp.lt.s32.totalorder %s13, 2
    // Predicated region
    $region29: #{model_forward.2} parent=5 // pred_check
      %p203 = pneg %p202
    $region30: #{model_forward.2} parent=5 // pred_check_branch
      %205 = sbr.rel (%p203) target = $region32
    $region31: #{model_forward.2} parent=5 // pred_region
      // Predicated region
      $region33: #{model_forward.2} parent=31 // pred_check
        %p206 = pneg %p33
      $region34: #{model_forward.2} parent=31 // pred_check_branch
        %208 = sbr.rel (%p206) target = $region36
      $region35: #{model_forward.2} parent=31 // pred_region
        %p209 = scmp.lt.s32.totalorder %s13, 1
        %s210 = scalar_select %p209, %s13, 1
        %s211 = smul.addr %s210, 45
        %s212 = smul.addr %s211, 8
        %s213 = scalar_lea.vmem %s0, %s212
      $region36: #{model_forward.2} parent=31 // pred_fallthru
        _
    $region32: #{model_forward.2} parent=5 // pred_fallthru
      _
    %p214 = scmp.le.s32.totalorder 1, %s13
    %p215 = scmp.lt.s32.totalorder %s13, 3
    %p216 = pnand %p214, %p215
    %p217 = pneg %p216
    // Predicated region
    $region37: #{model_forward.2} parent=5 // pred_check
      _
    $region38: #{model_forward.2} parent=5 // pred_check_branch
      %219 = sbr.rel (%p216) target = $region40
    $region39: #{model_forward.2} parent=5 // pred_region
      %s220 = ssub.s32 %s13, 1
      %p221 = scmp.lt.s32.totalorder %s18, 1
      %s222 = scalar_select %p221, %s18, 1
      %s223 = smul.addr %s222, 45
      %s224 = smul.addr %s223, 8
      %s225 = scalar_lea.vmem %s0, %s224
      %p226 = pneg %p39
      %p227 = pneg %p36
      %p228 = pneg %p60
      %p229 = pneg %p57
      %p230 = pneg %p81
      %p231 = pneg %p78
      %p232 = pneg %p102
      %p233 = pneg %p99
      %p234 = pneg %p123
      %p235 = pneg %p120
      %p236 = pneg %p149
      %p237 = pneg %p146
      %p238 = scmp.lt.s32.totalorder %s18, 1
      %s239 = scalar_select %p238, %s18, 1
      %s240 = smul.addr %s239, 5
      %s241 = smul.addr %s240, 8
      %s242 = scalar_lea.vmem %s5, %s241
      %p243 = pneg %p175
      %p244 = pneg %p172
      %p245 = scmp.lt.s32.totalorder %s18, 1
      %s246 = scalar_select %p245, %s18, 1
      %s247 = smul.addr %s246, 5
      %s248 = smul.addr %s247, 8
      %s249 = scalar_lea.vmem %s6, %s248
      %p250 = scmp.lt.s32.totalorder %s18, 1
      %s251 = scalar_select %p250, %s18, 1
      %s252 = smul.addr %s251, 45
      %s253 = smul.addr %s252, 8
      %s254 = scalar_lea.vmem %s0, %s253
      %p255 = scmp.lt.s32.totalorder %s18, 1
      %s256 = scalar_select %p255, %s18, 1
      %s257 = smul.addr %s256, 5
      %s258 = smul.addr %s257, 8
      %s259 = scalar_lea.vmem %s5, %s258
      %p260 = scmp.lt.s32.totalorder %s18, 1
      %s261 = scalar_select %p260, %s18, 1
      %s262 = smul.addr %s261, 5
      %s263 = smul.addr %s262, 8
      %s264 = scalar_lea.vmem %s6, %s263
      %v265 = vld [vmem:[%s254] sm:$0xff]
      %v266 = vld [vmem:[%s254 + $0x8] sm:$0xff]
      %v267 = vld [vmem:[%s254 + $0x10] sm:$0xff]
      %v268 = vld [vmem:[%s254 + $0x18] sm:$0xff]
      %v269 = vld [vmem:[%s254 + $0x20] sm:$0xff]
      %v270 = vld [vmem:[%s254 + $0x28] sm:$0xff]
      %v271 = vld [vmem:[%s254 + $0x30] sm:$0xff]
      %v272 = vld [vmem:[%s254 + $0x38] sm:$0xff]
      %v273 = vld [vmem:[%s254 + $0x40] sm:$0xff]
      %v274 = vld [vmem:[%s254 + $0x48] sm:$0xff]
      %v275 = vld [vmem:[%s254 + $0x50] sm:$0xff]
      %v276 = vld [vmem:[%s254 + $0x58] sm:$0xff]
      %v277 = vld [vmem:[%s254 + $0x60] sm:$0xff]
      %v278 = vld [vmem:[%s254 + $0x68] sm:$0xff]
      %v279 = vld [vmem:[%s254 + $0x70] sm:$0xff]
      %v280 = vld [vmem:[%s254 + $0x78] sm:$0xff]
      %v281 = vld [vmem:[%s254 + $0x80] sm:$0xff]
      %v282 = vld [vmem:[%s254 + $0x88] sm:$0xff]
      %v283 = vld [vmem:[%s254 + $0x90] sm:$0xff]
      %v284 = vld [vmem:[%s254 + $0x98] sm:$0xff]
      %v285 = vld [vmem:[%s254 + $0xa0] sm:$0xff]
      %v286 = vld [vmem:[%s254 + $0xa8] sm:$0xff]
      %v287 = vld [vmem:[%s254 + $0xb0] sm:$0xff]
      %v288 = vld [vmem:[%s254 + $0xb8] sm:$0xff]
      %v289 = vld [vmem:[%s254 + $0xc0] sm:$0xff]
      %v290 = vld [vmem:[%s254 + $0xc8] sm:$0xff]
      %v291 = vld [vmem:[%s254 + $0xd0] sm:$0xff]
      %v292 = vld [vmem:[%s254 + $0xd8] sm:$0xff]
      %v293 = vld [vmem:[%s254 + $0xe0] sm:$0xff]
      %v294 = vld [vmem:[%s254 + $0xe8] sm:$0xff]
      %v295 = vld [vmem:[%s254 + $0xf0] sm:$0xff]
      %v296 = vld [vmem:[%s254 + $0xf8] sm:$0xff]
      %v297 = vld [vmem:[%s254 + $0x100] sm:$0xff]
      %v298 = vld [vmem:[%s254 + $0x108] sm:$0xff]
      %v299 = vld [vmem:[%s254 + $0x110] sm:$0xff]
      %v300 = vld [vmem:[%s254 + $0x118] sm:$0xff]
      %v301 = vld [vmem:[%s254 + $0x120] sm:$0xf]
      %v302 = vld [vmem:[%s254 + $0x128] sm:$0xf]
      %v303 = vld [vmem:[%s254 + $0x130] sm:$0xf]
      %v304 = vld [vmem:[%s254 + $0x138] sm:$0xf]
      %v305 = vld [vmem:[%s254 + $0x140] sm:$0xf]
      %v306 = vld [vmem:[%s254 + $0x148] sm:$0xf]
      %v307 = vld [vmem:[%s254 + $0x150] sm:$0xf]
      %v308 = vld [vmem:[%s254 + $0x158] sm:$0xf]
      %v309 = vld [vmem:[%s254 + $0x160] sm:$0xf]
      %v310 = vld [vmem:[%s1] sm:$0xff]
      %v311 = vld [vmem:[%s1 + $0x8] sm:$0xff]
      %v312 = vld [vmem:[%s1 + $0x10] sm:$0xff]
      %v313 = vld [vmem:[%s1 + $0x18] sm:$0xff]
      %v314 = vld [vmem:[%s1 + $0x20] sm:$0xff]
      %v315 = vld [vmem:[%s1 + $0x28] sm:$0xff]
      %v316 = vld [vmem:[%s1 + $0x30] sm:$0xff]
      %v317 = vld [vmem:[%s1 + $0x38] sm:$0xff]
      %v318 = vld [vmem:[%s1 + $0x40] sm:$0xff]
      %v319 = vld [vmem:[%s1 + $0x48] sm:$0xff]
      %v320 = vld [vmem:[%s1 + $0x50] sm:$0xff]
      %v321 = vld [vmem:[%s1 + $0x58] sm:$0xff]
      %v322 = vld [vmem:[%s1 + $0x60] sm:$0xff]
      %v323 = vld [vmem:[%s1 + $0x68] sm:$0xff]
      %v324 = vld [vmem:[%s1 + $0x70] sm:$0xff]
      %v325 = vld [vmem:[%s1 + $0x78] sm:$0xff]
      %v326 = vld [vmem:[%s1 + $0x80] sm:$0xff]
      %v327 = vld [vmem:[%s1 + $0x88] sm:$0xff]
      %v328 = vld [vmem:[%s1 + $0x90] sm:$0xff]
      %v329 = vld [vmem:[%s1 + $0x98] sm:$0xff]
      %v330 = vld [vmem:[%s1 + $0xa0] sm:$0xff]
      %v331 = vld [vmem:[%s1 + $0xa8] sm:$0xff]
      %v332 = vld [vmem:[%s1 + $0xb0] sm:$0xff]
      %v333 = vld [vmem:[%s1 + $0xb8] sm:$0xff]
      %v334 = vld [vmem:[%s1 + $0xc0] sm:$0xff]
      %v335 = vld [vmem:[%s1 + $0xc8] sm:$0xff]
      %v336 = vld [vmem:[%s1 + $0xd0] sm:$0xff]
      %v337 = vld [vmem:[%s1 + $0xd8] sm:$0xff]
      %v338 = vld [vmem:[%s1 + $0xe0] sm:$0xff]
      %v339 = vld [vmem:[%s1 + $0xe8] sm:$0xff]
      %v340 = vld [vmem:[%s1 + $0xf0] sm:$0xff]
      %v341 = vld [vmem:[%s1 + $0xf8] sm:$0xff]
      %v342 = vld [vmem:[%s1 + $0x100] sm:$0xff]
      %v343 = vld [vmem:[%s1 + $0x108] sm:$0xff]
      %v344 = vld [vmem:[%s1 + $0x110] sm:$0xff]
      %v345 = vld [vmem:[%s1 + $0x118] sm:$0xff]
      %v346 = vld [vmem:[%s1 + $0x120] sm:$0xff]
      %v347 = vld [vmem:[%s1 + $0x128] sm:$0xff]
      %v348 = vld [vmem:[%s1 + $0x130] sm:$0xff]
      %v349 = vld [vmem:[%s1 + $0x138] sm:$0xff]
      %v350 = vld [vmem:[%s1 + $0x140] sm:$0xff]
      %v351 = vld [vmem:[%s1 + $0x148] sm:$0xff]
      %v352 = vld [vmem:[%s1 + $0x150] sm:$0xff]
      %v353 = vld [vmem:[%s1 + $0x158] sm:$0xff]
      %v354 = vld [vmem:[%s1 + $0x160] sm:$0xff]
      %v355 = vld [vmem:[%s1 + $0x168] sm:$0xff]
      %v356 = vld [vmem:[%s1 + $0x170] sm:$0xff]
      %v357 = vld [vmem:[%s1 + $0x178] sm:$0xff]
      %v358 = vld [vmem:[%s1 + $0x180] sm:$0xff]
      %v359 = vld [vmem:[%s1 + $0x188] sm:$0xff]
      %v360 = vld [vmem:[%s1 + $0x190] sm:$0xff]
      %v361 = vld [vmem:[%s1 + $0x198] sm:$0xff]
      %v362 = vld [vmem:[%s1 + $0x1a0] sm:$0xff]
      %v363 = vld [vmem:[%s1 + $0x1a8] sm:$0xff]
      %v364 = vld [vmem:[%s1 + $0x1b0] sm:$0xff]
      %v365 = vld [vmem:[%s1 + $0x1b8] sm:$0xff]
      %v366 = vld [vmem:[%s1 + $0x1c0] sm:$0xff]
      %v367 = vld [vmem:[%s1 + $0x1c8] sm:$0xff]
      %v368 = vld [vmem:[%s1 + $0x1d0] sm:$0xff]
      %v369 = vld [vmem:[%s1 + $0x1d8] sm:$0xff]
      %v370 = vld [vmem:[%s1 + $0x1e0] sm:$0xff]
      %v371 = vld [vmem:[%s1 + $0x1e8] sm:$0xff]
      %v372 = vld [vmem:[%s1 + $0x1f0] sm:$0xff]
      %v373 = vld [vmem:[%s1 + $0x1f8] sm:$0xff]
      %v374 = vld [vmem:[%s1 + $0x200] sm:$0xff]
      %v375 = vld [vmem:[%s1 + $0x208] sm:$0xff]
      %v376 = vld [vmem:[%s1 + $0x210] sm:$0xff]
      %v377 = vld [vmem:[%s1 + $0x218] sm:$0xff]
      %v378 = vld [vmem:[%s1 + $0x220] sm:$0xff]
      %v379 = vld [vmem:[%s1 + $0x228] sm:$0xff]
      %v380 = vld [vmem:[%s1 + $0x230] sm:$0xff]
      %v381 = vld [vmem:[%s1 + $0x238] sm:$0xff]
      %v382 = vld [vmem:[%s1 + $0x240] sm:$0xff]
      %v383 = vld [vmem:[%s1 + $0x248] sm:$0xff]
      %v384 = vld [vmem:[%s1 + $0x250] sm:$0xff]
      %v385 = vld [vmem:[%s1 + $0x258] sm:$0xff]
      %v386 = vld [vmem:[%s1 + $0x260] sm:$0xff]
      %v387 = vld [vmem:[%s1 + $0x268] sm:$0xff]
      %v388 = vld [vmem:[%s1 + $0x270] sm:$0xff]
      %v389 = vld [vmem:[%s1 + $0x278] sm:$0xff]
      %v390 = vld [vmem:[%s1 + $0x280] sm:$0xff]
      %v391 = vld [vmem:[%s1 + $0x288] sm:$0xff]
      %v392 = vld [vmem:[%s1 + $0x290] sm:$0xff]
      %v393 = vld [vmem:[%s1 + $0x298] sm:$0xff]
      %v394 = vld [vmem:[%s1 + $0x2a0] sm:$0xff]
      %v395 = vld [vmem:[%s1 + $0x2a8] sm:$0xff]
      %v396 = vld [vmem:[%s1 + $0x2b0] sm:$0xff]
      %v397 = vld [vmem:[%s1 + $0x2b8] sm:$0xff]
      %v398 = vld [vmem:[%s1 + $0x2c0] sm:$0xff]
      %v399 = vld [vmem:[%s1 + $0x2c8] sm:$0xff]
      %v400 = vld [vmem:[%s1 + $0x2d0] sm:$0xff]
      %v401 = vld [vmem:[%s1 + $0x2d8] sm:$0xff]
      %v402 = vld [vmem:[%s1 + $0x2e0] sm:$0xff]
      %v403 = vld [vmem:[%s1 + $0x2e8] sm:$0xff]
      %v404 = vld [vmem:[%s1 + $0x2f0] sm:$0xff]
      %v405 = vld [vmem:[%s1 + $0x2f8] sm:$0xff]
      %v406 = vld [vmem:[%s1 + $0x300] sm:$0xff]
      %v407 = vld [vmem:[%s1 + $0x308] sm:$0xff]
      %v408 = vld [vmem:[%s1 + $0x310] sm:$0xff]
      %v409 = vld [vmem:[%s1 + $0x318] sm:$0xff]
      %v410 = vld [vmem:[%s1 + $0x320] sm:$0xff]
      %v411 = vld [vmem:[%s1 + $0x328] sm:$0xff]
      %v412 = vld [vmem:[%s1 + $0x330] sm:$0xff]
      %v413 = vld [vmem:[%s1 + $0x338] sm:$0xff]
      %v414 = vld [vmem:[%s1 + $0x340] sm:$0xff]
      %v415 = vld [vmem:[%s1 + $0x348] sm:$0xff]
      %v416 = vld [vmem:[%s1 + $0x350] sm:$0xff]
      %v417 = vld [vmem:[%s1 + $0x358] sm:$0xff]
      %v418 = vld [vmem:[%s1 + $0x360] sm:$0xff]
      %v419 = vld [vmem:[%s1 + $0x368] sm:$0xff]
      %v420 = vld [vmem:[%s1 + $0x370] sm:$0xff]
      %v421 = vld [vmem:[%s1 + $0x378] sm:$0xff]
      %v422 = vld [vmem:[%s1 + $0x380] sm:$0xff]
      %v423 = vld [vmem:[%s1 + $0x388] sm:$0xff]
      %v424 = vld [vmem:[%s1 + $0x390] sm:$0xff]
      %v425 = vld [vmem:[%s1 + $0x398] sm:$0xff]
      %v426 = vld [vmem:[%s1 + $0x3a0] sm:$0xff]
      %v427 = vld [vmem:[%s1 + $0x3a8] sm:$0xff]
      %v428 = vld [vmem:[%s1 + $0x3b0] sm:$0xff]
      %v429 = vld [vmem:[%s1 + $0x3b8] sm:$0xff]
      %v430 = vld [vmem:[%s1 + $0x3c0] sm:$0xff]
      %v431 = vld [vmem:[%s1 + $0x3c8] sm:$0xff]
      %v432 = vld [vmem:[%s1 + $0x3d0] sm:$0xff]
      %v433 = vld [vmem:[%s1 + $0x3d8] sm:$0xff]
      %v434 = vld [vmem:[%s1 + $0x3e0] sm:$0xff]
      %v435 = vld [vmem:[%s1 + $0x3e8] sm:$0xff]
      %v436 = vld [vmem:[%s1 + $0x3f0] sm:$0xff]
      %v437 = vld [vmem:[%s1 + $0x3f8] sm:$0xff]
      %v438 = vld [vmem:[%s1 + $0x400] sm:$0xff]
      %v439 = vld [vmem:[%s1 + $0x408] sm:$0xff]
      %v440 = vld [vmem:[%s1 + $0x410] sm:$0xff]
      %v441 = vld [vmem:[%s1 + $0x418] sm:$0xff]
      %v442 = vld [vmem:[%s1 + $0x420] sm:$0xff]
      %v443 = vld [vmem:[%s1 + $0x428] sm:$0xff]
      %v444 = vld [vmem:[%s1 + $0x430] sm:$0xff]
      %v445 = vld [vmem:[%s1 + $0x438] sm:$0xff]
      %v446 = vld [vmem:[%s1 + $0x440] sm:$0xff]
      %v447 = vld [vmem:[%s1 + $0x448] sm:$0xff]
      %v448 = vld [vmem:[%s1 + $0x450] sm:$0xff]
      %v449 = vld [vmem:[%s1 + $0x458] sm:$0xff]
      %v450 = vld [vmem:[%s1 + $0x460] sm:$0xff]
      %v451 = vld [vmem:[%s1 + $0x468] sm:$0xff]
      %v452 = vld [vmem:[%s1 + $0x470] sm:$0xff]
      %v453 = vld [vmem:[%s1 + $0x478] sm:$0xff]
      %v454 = vld [vmem:[%s2] sm:$0x1]
      %v456 = vlaneseq
      %v457 = vshrl.u32 %v456, 7
      %v458 = vsub.s32 0, %v457
      %v459 = vrot.slane %v454, %v458
      %461 = vmatprep.subr.mxu0 0.0
      %462 = vmatpush1.msra.mxu0 %v325
      %463 = vmatprep.subr.mxu0 0.0
      %464 = vmatpush1.msra.mxu0 %v324
      %465 = vmatprep.subr.mxu0 0.0
      %466 = vmatpush1.msra.mxu0 %v323
      %467 = vmatprep.subr.mxu0 0.0
      %468 = vmatpush1.msra.mxu0 %v322
      %469 = vmatprep.subr.mxu0 0.0
      %470 = vmatpush1.msra.mxu0 %v321
      %471 = vmatprep.subr.mxu0 0.0
      %472 = vmatpush1.msra.mxu0 %v320
      %473 = vmatprep.subr.mxu0 0.0
      %474 = vmatpush1.msra.mxu0 %v319
      %475 = vmatprep.subr.mxu0 0.0
      %476 = vmatpush1.msra.mxu0 %v318
      %477 = vmatprep.subr.mxu0 0.0
      %478 = vmatpush1.msra.mxu0 %v317
      %479 = vmatprep.subr.mxu0 0.0
      %480 = vmatpush1.msra.mxu0 %v316
      %481 = vmatprep.subr.mxu0 0.0
      %482 = vmatpush1.msra.mxu0 %v315
      %483 = vmatprep.subr.mxu0 0.0
      %484 = vmatpush1.msra.mxu0 %v314
      %485 = vmatprep.subr.mxu0 0.0
      %486 = vmatpush1.msra.mxu0 %v313
      %487 = vmatprep.subr.mxu0 0.0
      %488 = vmatpush1.msra.mxu0 %v312
      %489 = vmatprep.subr.mxu0 0.0
      %490 = vmatpush1.msra.mxu0 %v311
      %491 = vmatprep.subr.mxu0 0.0
      %492 = vmatpush1.msra.mxu0 %v310
      %493 = vmatprep.subr.mxu0 0.0
      %494 = vmatpush2.msra.mxu0 %v341
      %495 = vmatprep.subr.mxu0 0.0
      %496 = vmatpush2.msra.mxu0 %v340
      %497 = vmatprep.subr.mxu0 0.0
      %498 = vmatpush2.msra.mxu0 %v339
      %499 = vmatprep.subr.mxu0 0.0
      %500 = vmatpush2.msra.mxu0 %v338
      %501 = vmatprep.subr.mxu0 0.0
      %502 = vmatpush2.msra.mxu0 %v337
      %503 = vmatprep.subr.mxu0 0.0
      %504 = vmatpush2.msra.mxu0 %v336
      %505 = vmatprep.subr.mxu0 0.0
      %506 = vmatpush2.msra.mxu0 %v335
      %507 = vmatprep.subr.mxu0 0.0
      %508 = vmatpush2.msra.mxu0 %v334
      %509 = vmatprep.subr.mxu0 0.0
      %510 = vmatpush2.msra.mxu0 %v333
      %511 = vmatprep.subr.mxu0 0.0
      %512 = vmatpush2.msra.mxu0 %v332
      %513 = vmatprep.subr.mxu0 0.0
      %514 = vmatpush2.msra.mxu0 %v331
      %515 = vmatprep.subr.mxu0 0.0
      %516 = vmatpush2.msra.mxu0 %v330
      %517 = vmatprep.subr.mxu0 0.0
      %518 = vmatpush2.msra.mxu0 %v329
      %519 = vmatprep.subr.mxu0 0.0
      %520 = vmatpush2.msra.mxu0 %v328
      %521 = vmatprep.subr.mxu0 0.0
      %522 = vmatpush2.msra.mxu0 %v327
      %523 = vmatprep.subr.mxu0 0.0
      %524 = vmatpush2.msra.mxu0 %v326
      %525 = vmatprep.mubr.f32.mxu0 %v266
      %526 = vmatmul.mubr.f32.gmra.mxu0 %v265
      %v527 = vpop.f32.mrf.mxu0
      %v528 = vadd.f32 %v459, %v527
      %v529 = vpop.f32.mrf.mxu0
      %530 = vmatprep.mubr.f32.mxu0 %v275
      %531 = vmatmul.mubr.f32.gmra.mxu0 %v274
      %v532 = vpop.f32.mrf.mxu0
      %v533 = vadd.f32 %v459, %v532
      %v534 = vpop.f32.mrf.mxu0
      %535 = vmatprep.mubr.f32.mxu0 %v284
      %536 = vmatmul.mubr.f32.gmra.mxu0 %v283
      %v537 = vpop.f32.mrf.mxu0
      %v538 = vadd.f32 %v459, %v537
      %v539 = vpop.f32.mrf.mxu0
      %540 = vmatprep.mubr.f32.mxu0 %v293
      %541 = vmatmul.mubr.f32.gmra.mxu0 %v292
      %v542 = vpop.f32.mrf.mxu0
      %v543 = vadd.f32 %v459, %v542
      %v544 = vpop.f32.mrf.mxu0
      %545 = vmatprep.mubr.f32.mxu0 %v302
      %546 = vmatmul.mubr.f32.gmra.mxu0 %v301
      %v547 = vpop.f32.mrf.mxu0
      %v548 = vadd.f32 %v459, %v547
      %v549 = vpop.f32.mrf.mxu0
      %550 = vdwg.mxu0
      %551 = vmatprep.subr.mxu0 0.0
      %552 = vmatpush1.msra.mxu0 %v357
      %553 = vmatprep.subr.mxu0 0.0
      %554 = vmatpush1.msra.mxu0 %v356
      %555 = vmatprep.subr.mxu0 0.0
      %556 = vmatpush1.msra.mxu0 %v355
      %557 = vmatprep.subr.mxu0 0.0
      %558 = vmatpush1.msra.mxu0 %v354
      %559 = vmatprep.subr.mxu0 0.0
      %560 = vmatpush1.msra.mxu0 %v353
      %561 = vmatprep.subr.mxu0 0.0
      %562 = vmatpush1.msra.mxu0 %v352
      %563 = vmatprep.subr.mxu0 0.0
      %564 = vmatpush1.msra.mxu0 %v351
      %565 = vmatprep.subr.mxu0 0.0
      %566 = vmatpush1.msra.mxu0 %v350
      %567 = vmatprep.subr.mxu0 0.0
      %568 = vmatpush1.msra.mxu0 %v349
      %569 = vmatprep.subr.mxu0 0.0
      %570 = vmatpush1.msra.mxu0 %v348
      %571 = vmatprep.subr.mxu0 0.0
      %572 = vmatpush1.msra.mxu0 %v347
      %573 = vmatprep.subr.mxu0 0.0
      %574 = vmatpush1.msra.mxu0 %v346
      %575 = vmatprep.subr.mxu0 0.0
      %576 = vmatpush1.msra.mxu0 %v345
      %577 = vmatprep.subr.mxu0 0.0
      %578 = vmatpush1.msra.mxu0 %v344
      %579 = vmatprep.subr.mxu0 0.0
      %580 = vmatpush1.msra.mxu0 %v343
      %581 = vmatprep.subr.mxu0 0.0
      %582 = vmatpush1.msra.mxu0 %v342
      %583 = vmatprep.subr.mxu0 0.0
      %584 = vmatpush2.msra.mxu0 %v373
      %585 = vmatprep.subr.mxu0 0.0
      %586 = vmatpush2.msra.mxu0 %v372
      %587 = vmatprep.subr.mxu0 0.0
      %588 = vmatpush2.msra.mxu0 %v371
      %589 = vmatprep.subr.mxu0 0.0
      %590 = vmatpush2.msra.mxu0 %v370
      %591 = vmatprep.subr.mxu0 0.0
      %592 = vmatpush2.msra.mxu0 %v369
      %593 = vmatprep.subr.mxu0 0.0
      %594 = vmatpush2.msra.mxu0 %v368
      %595 = vmatprep.subr.mxu0 0.0
      %596 = vmatpush2.msra.mxu0 %v367
      %597 = vmatprep.subr.mxu0 0.0
      %598 = vmatpush2.msra.mxu0 %v366
      %599 = vmatprep.subr.mxu0 0.0
      %600 = vmatpush2.msra.mxu0 %v365
      %601 = vmatprep.subr.mxu0 0.0
      %602 = vmatpush2.msra.mxu0 %v364
      %603 = vmatprep.subr.mxu0 0.0
      %604 = vmatpush2.msra.mxu0 %v363
      %605 = vmatprep.subr.mxu0 0.0
      %606 = vmatpush2.msra.mxu0 %v362
      %607 = vmatprep.subr.mxu0 0.0
      %608 = vmatpush2.msra.mxu0 %v361
      %609 = vmatprep.subr.mxu0 0.0
      %610 = vmatpush2.msra.mxu0 %v360
      %611 = vmatprep.subr.mxu0 0.0
      %612 = vmatpush2.msra.mxu0 %v359
      %613 = vmatprep.subr.mxu0 0.0
      %614 = vmatpush2.msra.mxu0 %v358
      %615 = vmatprep.mubr.f32.mxu0 %v268
      %616 = vmatmul.mubr.f32.gmra.mxu0 %v267
      %v617 = vpop.f32.mrf.mxu0
      %v618 = vadd.f32 %v528, %v617
      %v619 = vpop.f32.mrf.mxu0
      %620 = vmatprep.mubr.f32.mxu0 %v277
      %621 = vmatmul.mubr.f32.gmra.mxu0 %v276
      %v622 = vpop.f32.mrf.mxu0
      %v623 = vadd.f32 %v533, %v622
      %v624 = vpop.f32.mrf.mxu0
      %625 = vmatprep.mubr.f32.mxu0 %v286
      %626 = vmatmul.mubr.f32.gmra.mxu0 %v285
      %v627 = vpop.f32.mrf.mxu0
      %v628 = vadd.f32 %v538, %v627
      %v629 = vpop.f32.mrf.mxu0
      %630 = vmatprep.mubr.f32.mxu0 %v295
      %631 = vmatmul.mubr.f32.gmra.mxu0 %v294
      %v632 = vpop.f32.mrf.mxu0
      %v633 = vadd.f32 %v543, %v632
      %v634 = vpop.f32.mrf.mxu0
      %635 = vmatprep.mubr.f32.mxu0 %v304
      %636 = vmatmul.mubr.f32.gmra.mxu0 %v303
      %v637 = vpop.f32.mrf.mxu0
      %v638 = vadd.f32 %v548, %v637
      %v639 = vpop.f32.mrf.mxu0
      %640 = vdwg.mxu0
      %641 = vmatprep.subr.mxu0 0.0
      %642 = vmatpush1.msra.mxu0 %v389
      %643 = vmatprep.subr.mxu0 0.0
      %644 = vmatpush1.msra.mxu0 %v388
      %645 = vmatprep.subr.mxu0 0.0
      %646 = vmatpush1.msra.mxu0 %v387
      %647 = vmatprep.subr.mxu0 0.0
      %648 = vmatpush1.msra.mxu0 %v386
      %649 = vmatprep.subr.mxu0 0.0
      %650 = vmatpush1.msra.mxu0 %v385
      %651 = vmatprep.subr.mxu0 0.0
      %652 = vmatpush1.msra.mxu0 %v384
      %653 = vmatprep.subr.mxu0 0.0
      %654 = vmatpush1.msra.mxu0 %v383
      %655 = vmatprep.subr.mxu0 0.0
      %656 = vmatpush1.msra.mxu0 %v382
      %657 = vmatprep.subr.mxu0 0.0
      %658 = vmatpush1.msra.mxu0 %v381
      %659 = vmatprep.subr.mxu0 0.0
      %660 = vmatpush1.msra.mxu0 %v380
      %661 = vmatprep.subr.mxu0 0.0
      %662 = vmatpush1.msra.mxu0 %v379
      %663 = vmatprep.subr.mxu0 0.0
      %664 = vmatpush1.msra.mxu0 %v378
      %665 = vmatprep.subr.mxu0 0.0
      %666 = vmatpush1.msra.mxu0 %v377
      %667 = vmatprep.subr.mxu0 0.0
      %668 = vmatpush1.msra.mxu0 %v376
      %669 = vmatprep.subr.mxu0 0.0
      %670 = vmatpush1.msra.mxu0 %v375
      %671 = vmatprep.subr.mxu0 0.0
      %672 = vmatpush1.msra.mxu0 %v374
      %673 = vmatprep.subr.mxu0 0.0
      %674 = vmatpush2.msra.mxu0 %v405
      %675 = vmatprep.subr.mxu0 0.0
      %676 = vmatpush2.msra.mxu0 %v404
      %677 = vmatprep.subr.mxu0 0.0
      %678 = vmatpush2.msra.mxu0 %v403
      %679 = vmatprep.subr.mxu0 0.0
      %680 = vmatpush2.msra.mxu0 %v402
      %681 = vmatprep.subr.mxu0 0.0
      %682 = vmatpush2.msra.mxu0 %v401
      %683 = vmatprep.subr.mxu0 0.0
      %684 = vmatpush2.msra.mxu0 %v400
      %685 = vmatprep.subr.mxu0 0.0
      %686 = vmatpush2.msra.mxu0 %v399
      %687 = vmatprep.subr.mxu0 0.0
      %688 = vmatpush2.msra.mxu0 %v398
      %689 = vmatprep.subr.mxu0 0.0
      %690 = vmatpush2.msra.mxu0 %v397
      %691 = vmatprep.subr.mxu0 0.0
      %692 = vmatpush2.msra.mxu0 %v396
      %693 = vmatprep.subr.mxu0 0.0
      %694 = vmatpush2.msra.mxu0 %v395
      %695 = vmatprep.subr.mxu0 0.0
      %696 = vmatpush2.msra.mxu0 %v394
      %697 = vmatprep.subr.mxu0 0.0
      %698 = vmatpush2.msra.mxu0 %v393
      %699 = vmatprep.subr.mxu0 0.0
      %700 = vmatpush2.msra.mxu0 %v392
      %701 = vmatprep.subr.mxu0 0.0
      %702 = vmatpush2.msra.mxu0 %v391
      %703 = vmatprep.subr.mxu0 0.0
      %704 = vmatpush2.msra.mxu0 %v390
      %705 = vmatprep.mubr.f32.mxu0 %v270
      %706 = vmatmul.mubr.f32.gmra.mxu0 %v269
      %v707 = vpop.f32.mrf.mxu0
      %v708 = vadd.f32 %v618, %v707
      %v709 = vpop.f32.mrf.mxu0
      %710 = vmatprep.mubr.f32.mxu0 %v279
      %711 = vmatmul.mubr.f32.gmra.mxu0 %v278
      %v712 = vpop.f32.mrf.mxu0
      %v713 = vadd.f32 %v623, %v712
      %v714 = vpop.f32.mrf.mxu0
      %715 = vmatprep.mubr.f32.mxu0 %v288
      %716 = vmatmul.mubr.f32.gmra.mxu0 %v287
      %v717 = vpop.f32.mrf.mxu0
      %v718 = vadd.f32 %v628, %v717
      %v719 = vpop.f32.mrf.mxu0
      %720 = vmatprep.mubr.f32.mxu0 %v297
      %721 = vmatmul.mubr.f32.gmra.mxu0 %v296
      %v722 = vpop.f32.mrf.mxu0
      %v723 = vadd.f32 %v633, %v722
      %v724 = vpop.f32.mrf.mxu0
      %725 = vmatprep.mubr.f32.mxu0 %v306
      %726 = vmatmul.mubr.f32.gmra.mxu0 %v305
      %v727 = vpop.f32.mrf.mxu0
      %v728 = vadd.f32 %v638, %v727
      %v729 = vpop.f32.mrf.mxu0
      %730 = vdwg.mxu0
      %731 = vmatprep.subr.mxu0 0.0
      %732 = vmatpush1.msra.mxu0 %v421
      %733 = vmatprep.subr.mxu0 0.0
      %734 = vmatpush1.msra.mxu0 %v420
      %735 = vmatprep.subr.mxu0 0.0
      %736 = vmatpush1.msra.mxu0 %v419
      %737 = vmatprep.subr.mxu0 0.0
      %738 = vmatpush1.msra.mxu0 %v418
      %739 = vmatprep.subr.mxu0 0.0
      %740 = vmatpush1.msra.mxu0 %v417
      %741 = vmatprep.subr.mxu0 0.0
      %742 = vmatpush1.msra.mxu0 %v416
      %743 = vmatprep.subr.mxu0 0.0
      %744 = vmatpush1.msra.mxu0 %v415
      %745 = vmatprep.subr.mxu0 0.0
      %746 = vmatpush1.msra.mxu0 %v414
      %747 = vmatprep.subr.mxu0 0.0
      %748 = vmatpush1.msra.mxu0 %v413
      %749 = vmatprep.subr.mxu0 0.0
      %750 = vmatpush1.msra.mxu0 %v412
      %751 = vmatprep.subr.mxu0 0.0
      %752 = vmatpush1.msra.mxu0 %v411
      %753 = vmatprep.subr.mxu0 0.0
      %754 = vmatpush1.msra.mxu0 %v410
      %755 = vmatprep.subr.mxu0 0.0
      %756 = vmatpush1.msra.mxu0 %v409
      %757 = vmatprep.subr.mxu0 0.0
      %758 = vmatpush1.msra.mxu0 %v408
      %759 = vmatprep.subr.mxu0 0.0
      %760 = vmatpush1.msra.mxu0 %v407
      %761 = vmatprep.subr.mxu0 0.0
      %762 = vmatpush1.msra.mxu0 %v406
      %763 = vmatprep.subr.mxu0 0.0
      %764 = vmatpush2.msra.mxu0 %v437
      %765 = vmatprep.subr.mxu0 0.0
      %766 = vmatpush2.msra.mxu0 %v436
      %767 = vmatprep.subr.mxu0 0.0
      %768 = vmatpush2.msra.mxu0 %v435
      %769 = vmatprep.subr.mxu0 0.0
      %770 = vmatpush2.msra.mxu0 %v434
      %771 = vmatprep.subr.mxu0 0.0
      %772 = vmatpush2.msra.mxu0 %v433
      %773 = vmatprep.subr.mxu0 0.0
      %774 = vmatpush2.msra.mxu0 %v432
      %775 = vmatprep.subr.mxu0 0.0
      %776 = vmatpush2.msra.mxu0 %v431
      %777 = vmatprep.subr.mxu0 0.0
      %778 = vmatpush2.msra.mxu0 %v430
      %779 = vmatprep.subr.mxu0 0.0
      %780 = vmatpush2.msra.mxu0 %v429
      %781 = vmatprep.subr.mxu0 0.0
      %782 = vmatpush2.msra.mxu0 %v428
      %783 = vmatprep.subr.mxu0 0.0
      %784 = vmatpush2.msra.mxu0 %v427
      %785 = vmatprep.subr.mxu0 0.0
      %786 = vmatpush2.msra.mxu0 %v426
      %787 = vmatprep.subr.mxu0 0.0
      %788 = vmatpush2.msra.mxu0 %v425
      %789 = vmatprep.subr.mxu0 0.0
      %790 = vmatpush2.msra.mxu0 %v424
      %791 = vmatprep.subr.mxu0 0.0
      %792 = vmatpush2.msra.mxu0 %v423
      %793 = vmatprep.subr.mxu0 0.0
      %794 = vmatpush2.msra.mxu0 %v422
      %795 = vmatprep.mubr.f32.mxu0 %v272
      %796 = vmatmul.mubr.f32.gmra.mxu0 %v271
      %v797 = vpop.f32.mrf.mxu0
      %v798 = vadd.f32 %v708, %v797
      %v799 = vpop.f32.mrf.mxu0
      %800 = vmatprep.mubr.f32.mxu0 %v281
      %801 = vmatmul.mubr.f32.gmra.mxu0 %v280
      %v802 = vpop.f32.mrf.mxu0
      %v803 = vadd.f32 %v713, %v802
      %v804 = vpop.f32.mrf.mxu0
      %805 = vmatprep.mubr.f32.mxu0 %v290
      %806 = vmatmul.mubr.f32.gmra.mxu0 %v289
      %v807 = vpop.f32.mrf.mxu0
      %v808 = vadd.f32 %v718, %v807
      %v809 = vpop.f32.mrf.mxu0
      %810 = vmatprep.mubr.f32.mxu0 %v299
      %811 = vmatmul.mubr.f32.gmra.mxu0 %v298
      %v812 = vpop.f32.mrf.mxu0
      %v813 = vadd.f32 %v723, %v812
      %v814 = vpop.f32.mrf.mxu0
      %815 = vmatprep.mubr.f32.mxu0 %v308
      %816 = vmatmul.mubr.f32.gmra.mxu0 %v307
      %v817 = vpop.f32.mrf.mxu0
      %v818 = vadd.f32 %v728, %v817
      %v819 = vpop.f32.mrf.mxu0
      %820 = vdwg.mxu0
      %821 = vmatprep.subr.mxu0 0.0
      %822 = vmatpush1.msra.mxu0 %v453
      %823 = vmatprep.subr.mxu0 0.0
      %824 = vmatpush1.msra.mxu0 %v452
      %825 = vmatprep.subr.mxu0 0.0
      %826 = vmatpush1.msra.mxu0 %v451
      %827 = vmatprep.subr.mxu0 0.0
      %828 = vmatpush1.msra.mxu0 %v450
      %829 = vmatprep.subr.mxu0 0.0
      %830 = vmatpush1.msra.mxu0 %v449
      %831 = vmatprep.subr.mxu0 0.0
      %832 = vmatpush1.msra.mxu0 %v448
      %833 = vmatprep.subr.mxu0 0.0
      %834 = vmatpush1.msra.mxu0 %v447
      %835 = vmatprep.subr.mxu0 0.0
      %836 = vmatpush1.msra.mxu0 %v446
      %837 = vmatprep.subr.mxu0 0.0
      %838 = vmatpush1.msra.mxu0 %v445
      %839 = vmatprep.subr.mxu0 0.0
      %840 = vmatpush1.msra.mxu0 %v444
      %841 = vmatprep.subr.mxu0 0.0
      %842 = vmatpush1.msra.mxu0 %v443
      %843 = vmatprep.subr.mxu0 0.0
      %844 = vmatpush1.msra.mxu0 %v442
      %845 = vmatprep.subr.mxu0 0.0
      %846 = vmatpush1.msra.mxu0 %v441
      %847 = vmatprep.subr.mxu0 0.0
      %848 = vmatpush1.msra.mxu0 %v440
      %849 = vmatprep.subr.mxu0 0.0
      %850 = vmatpush1.msra.mxu0 %v439
      %851 = vmatprep.subr.mxu0 0.0
      %852 = vmatpush1.msra.mxu0 %v438
      %853 = vmatprep.subr.mxu0 0.0
      %854 = vmatpush2.msra.mxu0 0.0
      %855 = vmatprep.subr.mxu0 0.0
      %856 = vmatpush2.msra.mxu0 0.0
      %857 = vmatprep.subr.mxu0 0.0
      %858 = vmatpush2.msra.mxu0 0.0
      %859 = vmatprep.subr.mxu0 0.0
      %860 = vmatpush2.msra.mxu0 0.0
      %861 = vmatprep.subr.mxu0 0.0
      %862 = vmatpush2.msra.mxu0 0.0
      %863 = vmatprep.subr.mxu0 0.0
      %864 = vmatpush2.msra.mxu0 0.0
      %865 = vmatprep.subr.mxu0 0.0
      %866 = vmatpush2.msra.mxu0 0.0
      %867 = vmatprep.subr.mxu0 0.0
      %868 = vmatpush2.msra.mxu0 0.0
      %869 = vmatprep.subr.mxu0 0.0
      %870 = vmatpush2.msra.mxu0 0.0
      %871 = vmatprep.subr.mxu0 0.0
      %872 = vmatpush2.msra.mxu0 0.0
      %873 = vmatprep.subr.mxu0 0.0
      %874 = vmatpush2.msra.mxu0 0.0
      %875 = vmatprep.subr.mxu0 0.0
      %876 = vmatpush2.msra.mxu0 0.0
      %877 = vmatprep.subr.mxu0 0.0
      %878 = vmatpush2.msra.mxu0 0.0
      %879 = vmatprep.subr.mxu0 0.0
      %880 = vmatpush2.msra.mxu0 0.0
      %881 = vmatprep.subr.mxu0 0.0
      %882 = vmatpush2.msra.mxu0 0.0
      %883 = vmatprep.subr.mxu0 0.0
      %884 = vmatpush2.msra.mxu0 0.0
      %885 = vmatprep.mubr.f32.mxu0 0.0
      %886 = vmatmul.mubr.f32.gmra.mxu0 %v273
      %v887 = vpop.f32.mrf.mxu0
      %v888 = vadd.f32 %v798, %v887
      %v889 = vpop.f32.mrf.mxu0
      %890 = vmatprep.mubr.f32.mxu0 0.0
      %891 = vmatmul.mubr.f32.gmra.mxu0 %v282
      %v892 = vpop.f32.mrf.mxu0
      %v893 = vadd.f32 %v803, %v892
      %v894 = vpop.f32.mrf.mxu0
      %895 = vmatprep.mubr.f32.mxu0 0.0
      %896 = vmatmul.mubr.f32.gmra.mxu0 %v291
      %v897 = vpop.f32.mrf.mxu0
      %v898 = vadd.f32 %v808, %v897
      %v899 = vpop.f32.mrf.mxu0
      %900 = vmatprep.mubr.f32.mxu0 0.0
      %901 = vmatmul.mubr.f32.gmra.mxu0 %v300
      %v902 = vpop.f32.mrf.mxu0
      %v903 = vadd.f32 %v813, %v902
      %v904 = vpop.f32.mrf.mxu0
      %905 = vmatprep.mubr.f32.mxu0 0.0
      %906 = vmatmul.mubr.f32.gmra.mxu0 %v309
      %v907 = vpop.f32.mrf.mxu0
      %v908 = vadd.f32 %v818, %v907
      %v909 = vpop.f32.mrf.mxu0
      %910 = vdwg.mxu0
      %vm911 = vcmask 523264
      %912 = vst.msk [vmem:[%s259] sm:$0xff] %vm911, %v888
      %913 = vst.msk [vmem:[%s259 + $0x8] sm:$0xff] %vm911, %v893
      %914 = vst.msk [vmem:[%s259 + $0x10] sm:$0xff] %vm911, %v898
      %915 = vst.msk [vmem:[%s259 + $0x18] sm:$0xff] %vm911, %v903
      %vm916 = vcmask 519168
      %917 = vst.msk [vmem:[%s259 + $0x20] sm:$0xf] %vm916, %v908
      %v918 = vld [vmem:[%s3] sm:$0xff]
      %v919 = vld [vmem:[%s3 + $0x8] sm:$0xff]
      %v920 = vld [vmem:[%s3 + $0x10] sm:$0xff]
      %v921 = vld [vmem:[%s3 + $0x18] sm:$0xff]
      %v922 = vld [vmem:[%s3 + $0x20] sm:$0xff]
      %v923 = vld [vmem:[%s3 + $0x28] sm:$0xff]
      %v924 = vld [vmem:[%s3 + $0x30] sm:$0xff]
      %v925 = vld [vmem:[%s3 + $0x38] sm:$0xff]
      %v926 = vld [vmem:[%s4] sm:$0xff]
      %v927 = vld [vmem:[%s4 + $0x8] sm:$0xff]
      %v928 = vld [vmem:[%s4 + $0x10] sm:$0xff]
      %v929 = vld [vmem:[%s4 + $0x18] sm:$0xff]
      %v930 = vld [vmem:[%s4 + $0x20] sm:$0xf]
      %v932 = vsel %vm911, %v888, 0
      %v935 = vsel %vm911, %v893, 0
      %v938 = vsel %vm911, %v898, 0
      %v941 = vsel %vm911, %v903, 0
      %v944 = vsel %vm911, %v908, 0
      %946 = vmatprep.subr.mxu0 0.0
      %947 = vmatpush1.msra.mxu0 0.0
      %948 = vmatprep.subr.mxu0 0.0
      %949 = vmatpush1.msra.mxu0 0.0
      %950 = vmatprep.subr.mxu0 0.0
      %951 = vmatpush1.msra.mxu0 0.0
      %952 = vmatprep.subr.mxu0 0.0
      %953 = vmatpush1.msra.mxu0 0.0
      %954 = vmatprep.subr.mxu0 0.0
      %955 = vmatpush1.msra.mxu0 0.0
      %956 = vmatprep.subr.mxu0 0.0
      %957 = vmatpush1.msra.mxu0 0.0
      %958 = vmatprep.subr.mxu0 0.0
      %959 = vmatpush1.msra.mxu0 0.0
      %960 = vmatprep.subr.mxu0 0.0
      %961 = vmatpush1.msra.mxu0 0.0
      %962 = vmatprep.subr.mxu0 0.0
      %963 = vmatpush1.msra.mxu0 %v925
      %964 = vmatprep.subr.mxu0 0.0
      %965 = vmatpush1.msra.mxu0 %v924
      %966 = vmatprep.subr.mxu0 0.0
      %967 = vmatpush1.msra.mxu0 %v923
      %968 = vmatprep.subr.mxu0 0.0
      %969 = vmatpush1.msra.mxu0 %v922
      %970 = vmatprep.subr.mxu0 0.0
      %971 = vmatpush1.msra.mxu0 %v921
      %972 = vmatprep.subr.mxu0 0.0
      %973 = vmatpush1.msra.mxu0 %v920
      %974 = vmatprep.subr.mxu0 0.0
      %975 = vmatpush1.msra.mxu0 %v919
      %976 = vmatprep.subr.mxu0 0.0
      %977 = vmatpush1.msra.mxu0 %v918
      %978 = vmatprep.subr.mxu0 0.0
      %979 = vmatpush2.msra.mxu0 0.0
      %980 = vmatprep.subr.mxu0 0.0
      %981 = vmatpush2.msra.mxu0 0.0
      %982 = vmatprep.subr.mxu0 0.0
      %983 = vmatpush2.msra.mxu0 0.0
      %984 = vmatprep.subr.mxu0 0.0
      %985 = vmatpush2.msra.mxu0 0.0
      %986 = vmatprep.subr.mxu0 0.0
      %987 = vmatpush2.msra.mxu0 0.0
      %988 = vmatprep.subr.mxu0 0.0
      %989 = vmatpush2.msra.mxu0 0.0
      %990 = vmatprep.subr.mxu0 0.0
      %991 = vmatpush2.msra.mxu0 0.0
      %992 = vmatprep.subr.mxu0 0.0
      %993 = vmatpush2.msra.mxu0 0.0
      %994 = vmatprep.subr.mxu0 0.0
      %995 = vmatpush2.msra.mxu0 0.0
      %996 = vmatprep.subr.mxu0 0.0
      %997 = vmatpush2.msra.mxu0 0.0
      %998 = vmatprep.subr.mxu0 0.0
      %999 = vmatpush2.msra.mxu0 0.0
      %1000 = vmatprep.subr.mxu0 0.0
      %1001 = vmatpush2.msra.mxu0 0.0
      %1002 = vmatprep.subr.mxu0 0.0
      %1003 = vmatpush2.msra.mxu0 0.0
      %1004 = vmatprep.subr.mxu0 0.0
      %1005 = vmatpush2.msra.mxu0 0.0
      %1006 = vmatprep.subr.mxu0 0.0
      %1007 = vmatpush2.msra.mxu0 0.0
      %1008 = vmatprep.subr.mxu0 0.0
      %1009 = vmatpush2.msra.mxu0 0.0
      %1010 = vmatprep.mubr.f32.mxu0 0.0
      %1011 = vmatmul.mubr.f32.gmra.mxu0 %v932
      %v1012 = vpop.f32.mrf.mxu0
      %v1013 = vadd.f32 %v926, %v1012
      %v1014 = vpop.f32.mrf.mxu0
      %1015 = vmatprep.mubr.f32.mxu0 0.0
      %1016 = vmatmul.mubr.f32.gmra.mxu0 %v935
      %v1017 = vpop.f32.mrf.mxu0
      %v1018 = vadd.f32 %v927, %v1017
      %v1019 = vpop.f32.mrf.mxu0
      %1020 = vmatprep.mubr.f32.mxu0 0.0
      %1021 = vmatmul.mubr.f32.gmra.mxu0 %v938
      %v1022 = vpop.f32.mrf.mxu0
      %v1023 = vadd.f32 %v928, %v1022
      %v1024 = vpop.f32.mrf.mxu0
      %1025 = vmatprep.mubr.f32.mxu0 0.0
      %1026 = vmatmul.mubr.f32.gmra.mxu0 %v941
      %v1027 = vpop.f32.mrf.mxu0
      %v1028 = vadd.f32 %v929, %v1027
      %v1029 = vpop.f32.mrf.mxu0
      %1030 = vmatprep.mubr.f32.mxu0 0.0
      %1031 = vmatmul.mubr.f32.gmra.mxu0 %v944
      %v1032 = vpop.f32.mrf.mxu0
      %v1033 = vadd.f32 %v930, %v1032
      %v1034 = vpop.f32.mrf.mxu0
      %1035 = vdwg.mxu0
      %vm1036 = vcmask 261120
      %1037 = vst.msk [vmem:[%s264] sm:$0xff] %vm1036, %v1013
      %1038 = vst.msk [vmem:[%s264 + $0x8] sm:$0xff] %vm1036, %v1018
      %1039 = vst.msk [vmem:[%s264 + $0x10] sm:$0xff] %vm1036, %v1023
      %1040 = vst.msk [vmem:[%s264 + $0x18] sm:$0xff] %vm1036, %v1028
      %vm1041 = vcmask 257024
      %1042 = vst.msk [vmem:[%s264 + $0x20] sm:$0xf] %vm1041, %v1033
      %p1043 = scmp.lt.s32.totalorder %s18, 1
      %s1044 = scalar_select %p1043, %s18, 1
      %s1045 = smul.addr %s1044, 5
      %s1046 = smul.addr %s1045, 8
      %s1047 = scalar_lea.vmem %s5, %s1046
      %p1048 = scmp.lt.s32.totalorder %s18, 1
      %s1049 = scalar_select %p1048, %s18, 1
      %s1050 = smul.addr %s1049, 5
      %s1051 = smul.addr %s1050, 8
      %s1052 = scalar_lea.vmem %s6, %s1051
      // Predicated region
      $region41: #{model_forward.2} parent=39 // pred_check
        %p1053 = pneg %p146
      $region42: #{model_forward.2} parent=39 // pred_check_branch
        %1055 = sbr.rel (%p1053) target = $region44
      $region43: #{model_forward.2} parent=39 // pred_region
        _
      $region44: #{model_forward.2} parent=39 // pred_fallthru
        _
      // Predicated region
      $region45: #{model_forward.2} parent=39 // pred_check
        %p1056 = pneg %p172
      $region46: #{model_forward.2} parent=39 // pred_check_branch
        %1058 = sbr.rel (%p1056) target = $region48
      $region47: #{model_forward.2} parent=39 // pred_region
        _
      $region48: #{model_forward.2} parent=39 // pred_fallthru
        _
    $region40: #{model_forward.2} parent=5 // pred_fallthru
      _
    %p1059 = scmp.le.s32.totalorder 2, %s13
    // Predicated region
    $region49: #{model_forward.2} parent=5 // pred_check
      %p1060 = pneg %p1059
    $region50: #{model_forward.2} parent=5 // pred_check_branch
      %1062 = sbr.rel (%p1060) target = $region52
    $region51: #{model_forward.2} parent=5 // pred_region
      %s1063 = ssub.s32 %s13, 2
      // Predicated region
      $region53: #{model_forward.2} parent=51 // pred_check
        %p1064 = pneg %p152
      $region54: #{model_forward.2} parent=51 // pred_check_branch
        %1066 = sbr.rel (%p1064) target = $region56
      $region55: #{model_forward.2} parent=51 // pred_region
        %p1067 = scmp.lt.s32.totalorder %s19, 1
        %s1068 = scalar_select %p1067, %s19, 1
        %s1069 = smul.addr %s1068, 5
        %s1070 = smul.addr %s1069, 8
        %s1071 = scalar_lea.vmem %s5, %s1070
      $region56: #{model_forward.2} parent=51 // pred_fallthru
        _
      // Predicated region
      $region57: #{model_forward.2} parent=51 // pred_check
        %p1072 = pneg %p178
      $region58: #{model_forward.2} parent=51 // pred_check_branch
        %1074 = sbr.rel (%p1072) target = $region60
      $region59: #{model_forward.2} parent=51 // pred_region
        %p1075 = scmp.lt.s32.totalorder %s19, 1
        %s1076 = scalar_select %p1075, %s19, 1
        %s1077 = smul.addr %s1076, 5
        %s1078 = smul.addr %s1077, 8
        %s1079 = scalar_lea.vmem %s6, %s1078
      $region60: #{model_forward.2} parent=51 // pred_fallthru
        _
    $region52: #{model_forward.2} parent=5 // pred_fallthru
      _
  $region6: #{model_forward.2} parent=0 // loop_footer
    %s17 = sadd.s32 1, %s13
  $region7: #{model_forward.2} parent=0 // loop_footer_branch
    %12 = sbr.rel target = $region3
  $region8: #{model_forward.2} parent=0 // loop_exit
    _

// kernel: model_forward.3
$region0: #{model_forward.3}
  #allocation0 [shape = 'u32[]', space=smem, size = 0x4, offset = 0x4, fixed_abs, tag = 'smem constant byte address 0x4 - core index']
  #allocation1 [shape = 'u32[144,128]{1,0:T(1,128)}', space=vmem, size = 0x12000, scoped, tag = 'internal scratch']
  #allocation2 [shape = 'f32[2,32]{1,0:T(2,128)}', space=vmem, size = 0x400, scoped, tag = 'scratch operand']
  #allocation3 [shape = 'f32[2,32]{1,0:T(2,128)}', space=vmem, size = 0x400, scoped, tag = 'scratch operand']
  #allocation4 [shape = 'f32[1,32]{1,0:T(1,128)}', space=vmem, size = 0x200, scoped, tag = 'scratch operand']
  %s0 = inlined_call_operand.vmem [shape: f32[5,2,32], index: 0, kind: input, shape index: {}]
  %s1 = inlined_call_operand.vmem [shape: f32[72,32], index: 1, kind: input, shape index: {}]
  %s2 = inlined_call_operand.vmem [shape: f32[72,64], index: 2, kind: input, shape index: {}]
  %s3 = inlined_call_operand.vmem [shape: f32[72,2], index: 3, kind: input, shape index: {}]
  %s4 = inlined_call_operand.vmem [shape: f32[64,128], index: 4, kind: input, shape index: {}]
  %s5 = inlined_call_operand.vmem [shape: f32[1,128], index: 5, kind: input, shape index: {}]
  %s6 = inlined_call_operand.vmem [shape: f32[32,32], index: 6, kind: input, shape index: {}]
  %s7 = inlined_call_operand.vmem [shape: f32[32,1], index: 7, kind: input, shape index: {}]
  %s8 = inlined_call_operand.vmem [shape: f32[64,32], index: 8, kind: input, shape index: {}]
  %s9 = inlined_call_operand.vmem [shape: f32[1,32], index: 9, kind: input, shape index: {}]
  %s10 = inlined_call_operand.vmem [shape: f32[64,16], index: 10, kind: input, shape index: {}]
  %s11 = inlined_call_operand.vmem [shape: f32[1,16], index: 11, kind: input, shape index: {}]
  %s12 = inlined_call_operand.vmem [shape: f32[32,16], index: 12, kind: input, shape index: {}]
  %s13 = inlined_call_operand.vmem [shape: f32[1,16], index: 13, kind: input, shape index: {}]
  %s14 = inlined_call_operand.vmem [shape: f32[5,2,16], index: 14, kind: output, shape index: {}]
  %s15 = sld [smem:[#allocation0]]
  $region93: #{model_forward.3} parent=0
    _
  %s17 = ssub.s32 1, %s15
  %s18 = scalar_select 0, %s17, %s15
  loop: start=0, step=1, limit=7
  $region2: #{model_forward.3} parent=0 // loop_pre_header
    _
  $region3: #{model_forward.3} parent=0 // loop_header
    %s20 = sphi 0, %s24
    %p21 = scmp.ge.s32.totalorder %s20, 7
    %s30 = sphi 0, %s32
    %s33 = sphi 0, %s30
    %s34 = sphi 0, %s33
    %s50 = sphi 0, %s34
    %s54 = sphi 0, %s54
    %s56 = sphi 0, %s54
    %s57 = sphi 0, %s56
    %s71 = sphi 0, %s57
    %s75 = sphi 0, %s75
    %s77 = sphi 0, %s75
    %s78 = sphi 0, %s77
    %s92 = sphi 0, %s78
    %s96 = sphi 0, %s96
    %s98 = sphi 0, %s96
    %s99 = sphi 0, %s98
    %s113 = sphi 0, %s99
    %s117 = sphi 0, %s117
    %s119 = sphi 0, %s117
    %s120 = sphi 0, %s119
    %s134 = sphi 0, %s120
    %s138 = sphi 0, %s138
    %s140 = sphi 0, %s138
    %s141 = sphi 0, %s140
    %s155 = sphi 0, %s141
    %s159 = sphi 0, %s159
    %s161 = sphi 0, %s159
    %s162 = sphi 0, %s161
    %s176 = sphi 0, %s162
    %s180 = sphi 0, %s180
    %s182 = sphi 0, %s180
    %s183 = sphi 0, %s182
    %s197 = sphi 0, %s183
    %s201 = sphi 0, %s201
    %s203 = sphi 0, %s201
    %s204 = sphi 0, %s203
    %s218 = sphi 0, %s204
    %s222 = sphi 0, %s222
    %s224 = sphi 0, %s222
    %s225 = sphi 0, %s224
    %s239 = sphi 0, %s225
    %s243 = sphi 0, %s243
    %s245 = sphi 0, %s243
    %s246 = sphi 0, %s245
    %s260 = sphi 0, %s246
    %s264 = sphi 0, %s264
    %s266 = sphi 0, %s264
    %s267 = sphi 0, %s266
    %s281 = sphi 0, %s267
    %s285 = sphi 0, %s285
    %s287 = sphi 0, %s285
    %s288 = sphi 0, %s287
    %s302 = sphi 0, %s288
    %s306 = sphi 0, %s306
    %s308 = sphi 0, %s306
    %s309 = sphi 0, %s308
    %s323 = sphi 0, %s309
    %s329 = sphi 0, %s331
    %s332 = sphi 0, %s329
    %s333 = sphi 0, %s332
    %s349 = sphi 0, %s333
  $region4: #{model_forward.3} parent=0 // loop_header_branch
    %23 = sbr.rel (%p21) target = $region8
  $region5: #{model_forward.3} parent=0 // loop_body
    %s25 = ssub.s32 %s20, 1
    %s26 = ssub.s32 %s20, 2
    %s27 = sadd.s32 %s20, 1
    %s28 = ssub.s32 %s20, %s27
    %p29 = scmp.eq.s32.totalorder %s28, 0
    %s31 = sadd.s32 %s30, 1
    %s32 = scalar_select %p29, %s30, %s31
    %p35 = pneg %p29
    %p36 = scmp.eq.s32.totalorder %s20, 4
    %p37 = por %p35, %p36
    %p38 = scmp.ne.s32.totalorder %s30, %s33
    %p39 = scmp.eq.s32.totalorder %s20, 0
    %p40 = por %p38, %p39
    %p41 = scmp.ne.s32.totalorder %s30, %s33
    %p42 = scmp.eq.s32.totalorder %s25, 4
    %p43 = por %p41, %p42
    %p44 = scmp.ne.s32.totalorder %s33, %s34
    %p45 = scmp.eq.s32.totalorder %s25, 0
    %p46 = por %p44, %p45
    %p47 = scmp.ne.s32.totalorder %s33, %s34
    %p48 = scmp.eq.s32.totalorder %s26, 4
    %p49 = por %p47, %p48
    %p51 = scmp.ne.s32.totalorder %s34, %s50
    %p52 = scmp.eq.s32.totalorder %s26, 0
    %p53 = por %p51, %p52
    %s55 = sadd.s32 %s54, 1
    %p58 = scmp.eq.s32.totalorder %s20, 4
    %p59 = scmp.ne.s32.totalorder %s54, %s56
    %p60 = scmp.eq.s32.totalorder %s20, 0
    %p61 = por %p59, %p60
    %p62 = scmp.ne.s32.totalorder %s54, %s56
    %p63 = scmp.eq.s32.totalorder %s25, 4
    %p64 = por %p62, %p63
    %p65 = scmp.ne.s32.totalorder %s56, %s57
    %p66 = scmp.eq.s32.totalorder %s25, 0
    %p67 = por %p65, %p66
    %p68 = scmp.ne.s32.totalorder %s56, %s57
    %p69 = scmp.eq.s32.totalorder %s26, 4
    %p70 = por %p68, %p69
    %p72 = scmp.ne.s32.totalorder %s57, %s71
    %p73 = scmp.eq.s32.totalorder %s26, 0
    %p74 = por %p72, %p73
    %s76 = sadd.s32 %s75, 1
    %p79 = scmp.eq.s32.totalorder %s20, 4
    %p80 = scmp.ne.s32.totalorder %s75, %s77
    %p81 = scmp.eq.s32.totalorder %s20, 0
    %p82 = por %p80, %p81
    %p83 = scmp.ne.s32.totalorder %s75, %s77
    %p84 = scmp.eq.s32.totalorder %s25, 4
    %p85 = por %p83, %p84
    %p86 = scmp.ne.s32.totalorder %s77, %s78
    %p87 = scmp.eq.s32.totalorder %s25, 0
    %p88 = por %p86, %p87
    %p89 = scmp.ne.s32.totalorder %s77, %s78
    %p90 = scmp.eq.s32.totalorder %s26, 4
    %p91 = por %p89, %p90
    %p93 = scmp.ne.s32.totalorder %s78, %s92
    %p94 = scmp.eq.s32.totalorder %s26, 0
    %p95 = por %p93, %p94
    %s97 = sadd.s32 %s96, 1
    %p100 = scmp.eq.s32.totalorder %s20, 4
    %p101 = scmp.ne.s32.totalorder %s96, %s98
    %p102 = scmp.eq.s32.totalorder %s20, 0
    %p103 = por %p101, %p102
    %p104 = scmp.ne.s32.totalorder %s96, %s98
    %p105 = scmp.eq.s32.totalorder %s25, 4
    %p106 = por %p104, %p105
    %p107 = scmp.ne.s32.totalorder %s98, %s99
    %p108 = scmp.eq.s32.totalorder %s25, 0
    %p109 = por %p107, %p108
    %p110 = scmp.ne.s32.totalorder %s98, %s99
    %p111 = scmp.eq.s32.totalorder %s26, 4
    %p112 = por %p110, %p111
    %p114 = scmp.ne.s32.totalorder %s99, %s113
    %p115 = scmp.eq.s32.totalorder %s26, 0
    %p116 = por %p114, %p115
    %s118 = sadd.s32 %s117, 1
    %p121 = scmp.eq.s32.totalorder %s20, 4
    %p122 = scmp.ne.s32.totalorder %s117, %s119
    %p123 = scmp.eq.s32.totalorder %s20, 0
    %p124 = por %p122, %p123
    %p125 = scmp.ne.s32.totalorder %s117, %s119
    %p126 = scmp.eq.s32.totalorder %s25, 4
    %p127 = por %p125, %p126
    %p128 = scmp.ne.s32.totalorder %s119, %s120
    %p129 = scmp.eq.s32.totalorder %s25, 0
    %p130 = por %p128, %p129
    %p131 = scmp.ne.s32.totalorder %s119, %s120
    %p132 = scmp.eq.s32.totalorder %s26, 4
    %p133 = por %p131, %p132
    %p135 = scmp.ne.s32.totalorder %s120, %s134
    %p136 = scmp.eq.s32.totalorder %s26, 0
    %p137 = por %p135, %p136
    %s139 = sadd.s32 %s138, 1
    %p142 = scmp.eq.s32.totalorder %s20, 4
    %p143 = scmp.ne.s32.totalorder %s138, %s140
    %p144 = scmp.eq.s32.totalorder %s20, 0
    %p145 = por %p143, %p144
    %p146 = scmp.ne.s32.totalorder %s138, %s140
    %p147 = scmp.eq.s32.totalorder %s25, 4
    %p148 = por %p146, %p147
    %p149 = scmp.ne.s32.totalorder %s140, %s141
    %p150 = scmp.eq.s32.totalorder %s25, 0
    %p151 = por %p149, %p150
    %p152 = scmp.ne.s32.totalorder %s140, %s141
    %p153 = scmp.eq.s32.totalorder %s26, 4
    %p154 = por %p152, %p153
    %p156 = scmp.ne.s32.totalorder %s141, %s155
    %p157 = scmp.eq.s32.totalorder %s26, 0
    %p158 = por %p156, %p157
    %s160 = sadd.s32 %s159, 1
    %p163 = scmp.eq.s32.totalorder %s20, 4
    %p164 = scmp.ne.s32.totalorder %s159, %s161
    %p165 = scmp.eq.s32.totalorder %s20, 0
    %p166 = por %p164, %p165
    %p167 = scmp.ne.s32.totalorder %s159, %s161
    %p168 = scmp.eq.s32.totalorder %s25, 4
    %p169 = por %p167, %p168
    %p170 = scmp.ne.s32.totalorder %s161, %s162
    %p171 = scmp.eq.s32.totalorder %s25, 0
    %p172 = por %p170, %p171
    %p173 = scmp.ne.s32.totalorder %s161, %s162
    %p174 = scmp.eq.s32.totalorder %s26, 4
    %p175 = por %p173, %p174
    %p177 = scmp.ne.s32.totalorder %s162, %s176
    %p178 = scmp.eq.s32.totalorder %s26, 0
    %p179 = por %p177, %p178
    %s181 = sadd.s32 %s180, 1
    %p184 = scmp.eq.s32.totalorder %s20, 4
    %p185 = scmp.ne.s32.totalorder %s180, %s182
    %p186 = scmp.eq.s32.totalorder %s20, 0
    %p187 = por %p185, %p186
    %p188 = scmp.ne.s32.totalorder %s180, %s182
    %p189 = scmp.eq.s32.totalorder %s25, 4
    %p190 = por %p188, %p189
    %p191 = scmp.ne.s32.totalorder %s182, %s183
    %p192 = scmp.eq.s32.totalorder %s25, 0
    %p193 = por %p191, %p192
    %p194 = scmp.ne.s32.totalorder %s182, %s183
    %p195 = scmp.eq.s32.totalorder %s26, 4
    %p196 = por %p194, %p195
    %p198 = scmp.ne.s32.totalorder %s183, %s197
    %p199 = scmp.eq.s32.totalorder %s26, 0
    %p200 = por %p198, %p199
    %s202 = sadd.s32 %s201, 1
    %p205 = scmp.eq.s32.totalorder %s20, 4
    %p206 = scmp.ne.s32.totalorder %s201, %s203
    %p207 = scmp.eq.s32.totalorder %s20, 0
    %p208 = por %p206, %p207
    %p209 = scmp.ne.s32.totalorder %s201, %s203
    %p210 = scmp.eq.s32.totalorder %s25, 4
    %p211 = por %p209, %p210
    %p212 = scmp.ne.s32.totalorder %s203, %s204
    %p213 = scmp.eq.s32.totalorder %s25, 0
    %p214 = por %p212, %p213
    %p215 = scmp.ne.s32.totalorder %s203, %s204
    %p216 = scmp.eq.s32.totalorder %s26, 4
    %p217 = por %p215, %p216
    %p219 = scmp.ne.s32.totalorder %s204, %s218
    %p220 = scmp.eq.s32.totalorder %s26, 0
    %p221 = por %p219, %p220
    %s223 = sadd.s32 %s222, 1
    %p226 = scmp.eq.s32.totalorder %s20, 4
    %p227 = scmp.ne.s32.totalorder %s222, %s224
    %p228 = scmp.eq.s32.totalorder %s20, 0
    %p229 = por %p227, %p228
    %p230 = scmp.ne.s32.totalorder %s222, %s224
    %p231 = scmp.eq.s32.totalorder %s25, 4
    %p232 = por %p230, %p231
    %p233 = scmp.ne.s32.totalorder %s224, %s225
    %p234 = scmp.eq.s32.totalorder %s25, 0
    %p235 = por %p233, %p234
    %p236 = scmp.ne.s32.totalorder %s224, %s225
    %p237 = scmp.eq.s32.totalorder %s26, 4
    %p238 = por %p236, %p237
    %p240 = scmp.ne.s32.totalorder %s225, %s239
    %p241 = scmp.eq.s32.totalorder %s26, 0
    %p242 = por %p240, %p241
    %s244 = sadd.s32 %s243, 1
    %p247 = scmp.eq.s32.totalorder %s20, 4
    %p248 = scmp.ne.s32.totalorder %s243, %s245
    %p249 = scmp.eq.s32.totalorder %s20, 0
    %p250 = por %p248, %p249
    %p251 = scmp.ne.s32.totalorder %s243, %s245
    %p252 = scmp.eq.s32.totalorder %s25, 4
    %p253 = por %p251, %p252
    %p254 = scmp.ne.s32.totalorder %s245, %s246
    %p255 = scmp.eq.s32.totalorder %s25, 0
    %p256 = por %p254, %p255
    %p257 = scmp.ne.s32.totalorder %s245, %s246
    %p258 = scmp.eq.s32.totalorder %s26, 4
    %p259 = por %p257, %p258
    %p261 = scmp.ne.s32.totalorder %s246, %s260
    %p262 = scmp.eq.s32.totalorder %s26, 0
    %p263 = por %p261, %p262
    %s265 = sadd.s32 %s264, 1
    %p268 = scmp.eq.s32.totalorder %s20, 4
    %p269 = scmp.ne.s32.totalorder %s264, %s266
    %p270 = scmp.eq.s32.totalorder %s20, 0
    %p271 = por %p269, %p270
    %p272 = scmp.ne.s32.totalorder %s264, %s266
    %p273 = scmp.eq.s32.totalorder %s25, 4
    %p274 = por %p272, %p273
    %p275 = scmp.ne.s32.totalorder %s266, %s267
    %p276 = scmp.eq.s32.totalorder %s25, 0
    %p277 = por %p275, %p276
    %p278 = scmp.ne.s32.totalorder %s266, %s267
    %p279 = scmp.eq.s32.totalorder %s26, 4
    %p280 = por %p278, %p279
    %p282 = scmp.ne.s32.totalorder %s267, %s281
    %p283 = scmp.eq.s32.totalorder %s26, 0
    %p284 = por %p282, %p283
    %s286 = sadd.s32 %s285, 1
    %p289 = scmp.eq.s32.totalorder %s20, 4
    %p290 = scmp.ne.s32.totalorder %s285, %s287
    %p291 = scmp.eq.s32.totalorder %s20, 0
    %p292 = por %p290, %p291
    %p293 = scmp.ne.s32.totalorder %s285, %s287
    %p294 = scmp.eq.s32.totalorder %s25, 4
    %p295 = por %p293, %p294
    %p296 = scmp.ne.s32.totalorder %s287, %s288
    %p297 = scmp.eq.s32.totalorder %s25, 0
    %p298 = por %p296, %p297
    %p299 = scmp.ne.s32.totalorder %s287, %s288
    %p300 = scmp.eq.s32.totalorder %s26, 4
    %p301 = por %p299, %p300
    %p303 = scmp.ne.s32.totalorder %s288, %s302
    %p304 = scmp.eq.s32.totalorder %s26, 0
    %p305 = por %p303, %p304
    %s307 = sadd.s32 %s306, 1
    %p310 = scmp.eq.s32.totalorder %s20, 4
    %p311 = scmp.ne.s32.totalorder %s306, %s308
    %p312 = scmp.eq.s32.totalorder %s20, 0
    %p313 = por %p311, %p312
    %p314 = scmp.ne.s32.totalorder %s306, %s308
    %p315 = scmp.eq.s32.totalorder %s25, 4
    %p316 = por %p314, %p315
    %p317 = scmp.ne.s32.totalorder %s308, %s309
    %p318 = scmp.eq.s32.totalorder %s25, 0
    %p319 = por %p317, %p318
    %p320 = scmp.ne.s32.totalorder %s308, %s309
    %p321 = scmp.eq.s32.totalorder %s26, 4
    %p322 = por %p320, %p321
    %p324 = scmp.ne.s32.totalorder %s309, %s323
    %p325 = scmp.eq.s32.totalorder %s26, 0
    %p326 = por %p324, %p325
    %s327 = ssub.s32 %s20, %s27
    %p328 = scmp.eq.s32.totalorder %s327, 0
    %s330 = sadd.s32 %s329, 1
    %s331 = scalar_select %p328, %s329, %s330
    %p334 = pneg %p328
    %p335 = scmp.eq.s32.totalorder %s20, 4
    %p336 = por %p334, %p335
    %p337 = scmp.ne.s32.totalorder %s329, %s332
    %p338 = scmp.eq.s32.totalorder %s20, 0
    %p339 = por %p337, %p338
    %p340 = scmp.ne.s32.totalorder %s329, %s332
    %p341 = scmp.eq.s32.totalorder %s25, 4
    %p342 = por %p340, %p341
    %p343 = scmp.ne.s32.totalorder %s332, %s333
    %p344 = scmp.eq.s32.totalorder %s25, 0
    %p345 = por %p343, %p344
    %p346 = scmp.ne.s32.totalorder %s332, %s333
    %p347 = scmp.eq.s32.totalorder %s26, 4
    %p348 = por %p346, %p347
    %p350 = scmp.ne.s32.totalorder %s333, %s349
    %p351 = scmp.eq.s32.totalorder %s26, 0
    %p352 = por %p350, %p351
    %p353 = scmp.le.s32.totalorder 1, %s20
    %p354 = scmp.lt.s32.totalorder %s20, 6
    %p355 = pnand %p353, %p354
    %p356 = pneg %p355
    // Predicated region
    $region9: #{model_forward.3} parent=5 // pred_check
      _
    $region10: #{model_forward.3} parent=5 // pred_check_branch
      %358 = sbr.rel (%p355) target = $region12
    $region11: #{model_forward.3} parent=5 // pred_region
      %s359 = ssub.s32 %s20, 1
      // Predicated region
      $region13: #{model_forward.3} parent=11 // pred_check
        %p360 = pneg %p67
      $region14: #{model_forward.3} parent=11 // pred_check_branch
        %362 = sbr.rel (%p360) target = $region16
      $region15: #{model_forward.3} parent=11 // pred_region
        _
      $region16: #{model_forward.3} parent=11 // pred_fallthru
        _
      // Predicated region
      $region17: #{model_forward.3} parent=11 // pred_check
        %p363 = pneg %p88
      $region18: #{model_forward.3} parent=11 // pred_check_branch
        %365 = sbr.rel (%p363) target = $region20
      $region19: #{model_forward.3} parent=11 // pred_region
        _
      $region20: #{model_forward.3} parent=11 // pred_fallthru
        _
      // Predicated region
      $region21: #{model_forward.3} parent=11 // pred_check
        %p366 = pneg %p109
      $region22: #{model_forward.3} parent=11 // pred_check_branch
        %368 = sbr.rel (%p366) target = $region24
      $region23: #{model_forward.3} parent=11 // pred_region
        _
      $region24: #{model_forward.3} parent=11 // pred_fallthru
        _
      // Predicated region
      $region25: #{model_forward.3} parent=11 // pred_check
        %p369 = pneg %p130
      $region26: #{model_forward.3} parent=11 // pred_check_branch
        %371 = sbr.rel (%p369) target = $region28
      $region27: #{model_forward.3} parent=11 // pred_region
        _
      $region28: #{model_forward.3} parent=11 // pred_fallthru
        _
      // Predicated region
      $region29: #{model_forward.3} parent=11 // pred_check
        %p372 = pneg %p151
      $region30: #{model_forward.3} parent=11 // pred_check_branch
        %374 = sbr.rel (%p372) target = $region32
      $region31: #{model_forward.3} parent=11 // pred_region
        _
      $region32: #{model_forward.3} parent=11 // pred_fallthru
        _
      // Predicated region
      $region33: #{model_forward.3} parent=11 // pred_check
        %p375 = pneg %p172
      $region34: #{model_forward.3} parent=11 // pred_check_branch
        %377 = sbr.rel (%p375) target = $region36
      $region35: #{model_forward.3} parent=11 // pred_region
        _
      $region36: #{model_forward.3} parent=11 // pred_fallthru
        _
      // Predicated region
      $region37: #{model_forward.3} parent=11 // pred_check
        %p378 = pneg %p193
      $region38: #{model_forward.3} parent=11 // pred_check_branch
        %380 = sbr.rel (%p378) target = $region40
      $region39: #{model_forward.3} parent=11 // pred_region
        _
      $region40: #{model_forward.3} parent=11 // pred_fallthru
        _
      // Predicated region
      $region41: #{model_forward.3} parent=11 // pred_check
        %p381 = pneg %p214
      $region42: #{model_forward.3} parent=11 // pred_check_branch
        %383 = sbr.rel (%p381) target = $region44
      $region43: #{model_forward.3} parent=11 // pred_region
        _
      $region44: #{model_forward.3} parent=11 // pred_fallthru
        _
      // Predicated region
      $region45: #{model_forward.3} parent=11 // pred_check
        %p384 = pneg %p235
      $region46: #{model_forward.3} parent=11 // pred_check_branch
        %386 = sbr.rel (%p384) target = $region48
      $region47: #{model_forward.3} parent=11 // pred_region
        _
      $region48: #{model_forward.3} parent=11 // pred_fallthru
        _
      // Predicated region
      $region49: #{model_forward.3} parent=11 // pred_check
        %p387 = pneg %p256
      $region50: #{model_forward.3} parent=11 // pred_check_branch
        %389 = sbr.rel (%p387) target = $region52
      $region51: #{model_forward.3} parent=11 // pred_region
        _
      $region52: #{model_forward.3} parent=11 // pred_fallthru
        _
      // Predicated region
      $region53: #{model_forward.3} parent=11 // pred_check
        %p390 = pneg %p277
      $region54: #{model_forward.3} parent=11 // pred_check_branch
        %392 = sbr.rel (%p390) target = $region56
      $region55: #{model_forward.3} parent=11 // pred_region
        _
      $region56: #{model_forward.3} parent=11 // pred_fallthru
        _
      // Predicated region
      $region57: #{model_forward.3} parent=11 // pred_check
        %p393 = pneg %p298
      $region58: #{model_forward.3} parent=11 // pred_check_branch
        %395 = sbr.rel (%p393) target = $region60
      $region59: #{model_forward.3} parent=11 // pred_region
        _
      $region60: #{model_forward.3} parent=11 // pred_fallthru
        _
      // Predicated region
      $region61: #{model_forward.3} parent=11 // pred_check
        %p396 = pneg %p319
      $region62: #{model_forward.3} parent=11 // pred_check_branch
        %398 = sbr.rel (%p396) target = $region64
      $region63: #{model_forward.3} parent=11 // pred_region
        _
      $region64: #{model_forward.3} parent=11 // pred_fallthru
        _
    $region12: #{model_forward.3} parent=5 // pred_fallthru
      _
    %p399 = scmp.lt.s32.totalorder %s20, 5
    // Predicated region
    $region65: #{model_forward.3} parent=5 // pred_check
      %p400 = pneg %p399
    $region66: #{model_forward.3} parent=5 // pred_check_branch
      %402 = sbr.rel (%p400) target = $region68
    $region67: #{model_forward.3} parent=5 // pred_region
      // Predicated region
      $region69: #{model_forward.3} parent=67 // pred_check
        %p403 = pneg %p40
      $region70: #{model_forward.3} parent=67 // pred_check_branch
        %405 = sbr.rel (%p403) target = $region72
      $region71: #{model_forward.3} parent=67 // pred_region
        %p406 = scmp.lt.s32.totalorder %s20, 4
        %s407 = scalar_select %p406, %s20, 4
        %s408 = smul.addr %s407, 2
        %s409 = scalar_lea.vmem %s0, %s408
      $region72: #{model_forward.3} parent=67 // pred_fallthru
        _
    $region68: #{model_forward.3} parent=5 // pred_fallthru
      _
    %p410 = scmp.le.s32.totalorder 1, %s20
    %p411 = scmp.lt.s32.totalorder %s20, 6
    %p412 = pnand %p410, %p411
    %p413 = pneg %p412
    // Predicated region
    $region73: #{model_forward.3} parent=5 // pred_check
      _
    $region74: #{model_forward.3} parent=5 // pred_check_branch
      %415 = sbr.rel (%p412) target = $region76
    $region75: #{model_forward.3} parent=5 // pred_region
      %s416 = ssub.s32 %s20, 1
      %p417 = scmp.lt.s32.totalorder %s25, 4
      %s418 = scalar_select %p417, %s25, 4
      %s419 = smul.addr %s418, 2
      %s420 = scalar_lea.vmem %s0, %s419
      %p421 = pneg %p46
      %p422 = pneg %p43
      %p423 = pneg %p67
      %p424 = pneg %p64
      %p425 = pneg %p88
      %p426 = pneg %p85
      %p427 = pneg %p109
      %p428 = pneg %p106
      %p429 = pneg %p130
      %p430 = pneg %p127
      %p431 = pneg %p151
      %p432 = pneg %p148
      %p433 = pneg %p172
      %p434 = pneg %p169
      %p435 = pneg %p193
      %p436 = pneg %p190
      %p437 = pneg %p214
      %p438 = pneg %p211
      %p439 = pneg %p235
      %p440 = pneg %p232
      %p441 = pneg %p256
      %p442 = pneg %p253
      %p443 = pneg %p277
      %p444 = pneg %p274
      %p445 = pneg %p298
      %p446 = pneg %p295
      %p447 = pneg %p319
      %p448 = pneg %p316
      %p449 = pneg %p345
      %p450 = pneg %p342
      %p451 = scmp.lt.s32.totalorder %s25, 4
      %s452 = scalar_select %p451, %s25, 4
      %s453 = smul.addr %s452, 2
      %s454 = scalar_lea.vmem %s14, %s453
      %p455 = scmp.lt.s32.totalorder %s25, 4
      %s456 = scalar_select %p455, %s25, 4
      %s457 = smul.addr %s456, 2
      %s458 = scalar_lea.vmem %s0, %s457
      %p459 = scmp.lt.s32.totalorder %s25, 4
      %s460 = scalar_select %p459, %s25, 4
      %s461 = smul.addr %s460, 2
      %s462 = scalar_lea.vmem %s14, %s461
      %p463 = scmp.eq.s32.totalorder %s25, 0
      // Predicated region
      $region77: #{model_forward.3} parent=75 // pred_check
        %p464 = pneg %p463
      $region78: #{model_forward.3} parent=75 // pred_check_branch
        %466 = sbr.rel (%p464) target = $region80
      $region79: #{model_forward.3} parent=75 // pred_region
        %vm467 = vcmask 254976
        %468 = vst.msk [vmem:[#allocation2] sm:$0x3] %vm467, 0.0
        %469 = vst.msk [vmem:[#allocation3] sm:$0x3] %vm467, 0.0
        %vm470 = vcmask 253952
        %471 = vst.msk [vmem:[#allocation4] sm:$0x1] %vm470, 0.0
      $region80: #{model_forward.3} parent=75 // pred_fallthru
        _
      %v472 = vld [vmem:[#allocation2] sm:$0x3]
      %v473 = vld [vmem:[#allocation3] sm:$0x3]
      %v474 = vld [vmem:[%s458] sm:$0x3]
      %v475 = vld [vmem:[#allocation4] sm:$0x1]
      %v477 = vlaneseq
      %v478 = vshrl.u32 %v477, 7
      %v479 = vsub.s32 0, %v478
      %v480 = vrot.slane %v475, %v479
      %v482 = vadd.f32 %v474, %v480
      %484 = vrot.lane.b32.xlu0 %v472, 32
      %v485 = vpop.permute.xlu0 %484
      %vm487 = vcmask 261120
      %v488 = vsel %vm487, %v482, %v485
      %v489 = vld [vmem:[%s4] sm:$0xff]
      %v490 = vld [vmem:[%s4 + $0x8] sm:$0xff]
      %v491 = vld [vmem:[%s4 + $0x10] sm:$0xff]
      %v492 = vld [vmem:[%s4 + $0x18] sm:$0xff]
      %v493 = vld [vmem:[%s4 + $0x20] sm:$0xff]
      %v494 = vld [vmem:[%s4 + $0x28] sm:$0xff]
      %v495 = vld [vmem:[%s4 + $0x30] sm:$0xff]
      %v496 = vld [vmem:[%s4 + $0x38] sm:$0xff]
      %v497 = vld [vmem:[%s5] sm:$0x1]
      %v499 = vlaneseq
      %v500 = vshrl.u32 %v499, 7
      %v501 = vsub.s32 0, %v500
      %v502 = vrot.slane %v497, %v501
      %vm504 = vcmask 523264
      %v506 = vsel %vm504, %v488, 0
      %508 = vmatprep.subr.mxu0 0.0
      %509 = vmatpush1.msra.mxu0 0.0
      %510 = vmatprep.subr.mxu0 0.0
      %511 = vmatpush1.msra.mxu0 0.0
      %512 = vmatprep.subr.mxu0 0.0
      %513 = vmatpush1.msra.mxu0 0.0
      %514 = vmatprep.subr.mxu0 0.0
      %515 = vmatpush1.msra.mxu0 0.0
      %516 = vmatprep.subr.mxu0 0.0
      %517 = vmatpush1.msra.mxu0 0.0
      %518 = vmatprep.subr.mxu0 0.0
      %519 = vmatpush1.msra.mxu0 0.0
      %520 = vmatprep.subr.mxu0 0.0
      %521 = vmatpush1.msra.mxu0 0.0
      %522 = vmatprep.subr.mxu0 0.0
      %523 = vmatpush1.msra.mxu0 0.0
      %524 = vmatprep.subr.mxu0 0.0
      %525 = vmatpush1.msra.mxu0 %v496
      %526 = vmatprep.subr.mxu0 0.0
      %527 = vmatpush1.msra.mxu0 %v495
      %528 = vmatprep.subr.mxu0 0.0
      %529 = vmatpush1.msra.mxu0 %v494
      %530 = vmatprep.subr.mxu0 0.0
      %531 = vmatpush1.msra.mxu0 %v493
      %532 = vmatprep.subr.mxu0 0.0
      %533 = vmatpush1.msra.mxu0 %v492
      %534 = vmatprep.subr.mxu0 0.0
      %535 = vmatpush1.msra.mxu0 %v491
      %536 = vmatprep.subr.mxu0 0.0
      %537 = vmatpush1.msra.mxu0 %v490
      %538 = vmatprep.subr.mxu0 0.0
      %539 = vmatpush1.msra.mxu0 %v489
      %540 = vmatprep.subr.mxu0 0.0
      %541 = vmatpush2.msra.mxu0 0.0
      %542 = vmatprep.subr.mxu0 0.0
      %543 = vmatpush2.msra.mxu0 0.0
      %544 = vmatprep.subr.mxu0 0.0
      %545 = vmatpush2.msra.mxu0 0.0
      %546 = vmatprep.subr.mxu0 0.0
      %547 = vmatpush2.msra.mxu0 0.0
      %548 = vmatprep.subr.mxu0 0.0
      %549 = vmatpush2.msra.mxu0 0.0
      %550 = vmatprep.subr.mxu0 0.0
      %551 = vmatpush2.msra.mxu0 0.0
      %552 = vmatprep.subr.mxu0 0.0
      %553 = vmatpush2.msra.mxu0 0.0
      %554 = vmatprep.subr.mxu0 0.0
      %555 = vmatpush2.msra.mxu0 0.0
      %556 = vmatprep.subr.mxu0 0.0
      %557 = vmatpush2.msra.mxu0 0.0
      %558 = vmatprep.subr.mxu0 0.0
      %559 = vmatpush2.msra.mxu0 0.0
      %560 = vmatprep.subr.mxu0 0.0
      %561 = vmatpush2.msra.mxu0 0.0
      %562 = vmatprep.subr.mxu0 0.0
      %563 = vmatpush2.msra.mxu0 0.0
      %564 = vmatprep.subr.mxu0 0.0
      %565 = vmatpush2.msra.mxu0 0.0
      %566 = vmatprep.subr.mxu0 0.0
      %567 = vmatpush2.msra.mxu0 0.0
      %568 = vmatprep.subr.mxu0 0.0
      %569 = vmatpush2.msra.mxu0 0.0
      %570 = vmatprep.subr.mxu0 0.0
      %571 = vmatpush2.msra.mxu0 0.0
      %572 = vmatprep.mubr.f32.mxu0 0.0
      %573 = vmatmul.mubr.f32.gmra.mxu0 %v506
      %v574 = vpop.f32.mrf.mxu0
      %v575 = vadd.f32 %v502, %v574
      %v576 = vpop.f32.mrf.mxu0
      %577 = vdwg.mxu0
      %v578 = vxor.u32 %v575, 2147483648
      %v579 = vmul.f32 %v578, 1.442695
      %v580 = vpow.pop %v579
      %v581 = vadd.f32 %v580, 1.0
      %v582 = vrcp.pop %v581
      %v583 = vmul.f32 1.0, %v582
      %v584 = vtanh.pop %v575
      %586 = vrot.lane.b32.xlu0 %v473, 32
      %v587 = vpop.permute.xlu0 %586
      %v589 = vmul.f32 %v583, %v587
      %591 = vrot.lane.b32.xlu0 %v584, 64
      %v592 = vpop.permute.xlu0 %591
      %v594 = vmul.f32 %v583, %v592
      %596 = vrot.lane.b32.xlu0 %v594, 32
      %v597 = vpop.permute.xlu0 %596
      %v599 = vadd.f32 %v589, %v597
      %v600 = vtanh.pop %v599
      %602 = vrot.lane.b32.xlu0 %v600, 64
      %v603 = vpop.permute.xlu0 %602
      %v605 = vmul.f32 %v583, %v603
      %607 = vrot.lane.b32.xlu0 %v605, 32
      %v608 = vpop.permute.xlu0 %607
      %vm610 = vcmask 254976
      %611 = vst.msk [vmem:[#allocation2] sm:$0x3] %vm610, %v608
      %613 = vrot.lane.b32.xlu0 %v599, 96
      %v614 = vpop.permute.xlu0 %613
      %616 = vst.msk [vmem:[#allocation3] sm:$0x3] %vm610, %v614
      %v617 = vld [vmem:[%s6] sm:$0xff]
      %v618 = vld [vmem:[%s6 + $0x8] sm:$0xff]
      %v619 = vld [vmem:[%s6 + $0x10] sm:$0xff]
      %v620 = vld [vmem:[%s6 + $0x18] sm:$0xff]
      %v621 = vsel %vm487, %v608, 0
      %623 = vmatprep.subr.mxu0 0.0
      %624 = vmatpush1.msra.mxu0 0.0
      %625 = vmatprep.subr.mxu0 0.0
      %626 = vmatpush1.msra.mxu0 0.0
      %627 = vmatprep.subr.mxu0 0.0
      %628 = vmatpush1.msra.mxu0 0.0
      %629 = vmatprep.subr.mxu0 0.0
      %630 = vmatpush1.msra.mxu0 0.0
      %631 = vmatprep.subr.mxu0 0.0
      %632 = vmatpush1.msra.mxu0 0.0
      %633 = vmatprep.subr.mxu0 0.0
      %634 = vmatpush1.msra.mxu0 0.0
      %635 = vmatprep.subr.mxu0 0.0
      %636 = vmatpush1.msra.mxu0 0.0
      %637 = vmatprep.subr.mxu0 0.0
      %638 = vmatpush1.msra.mxu0 0.0
      %639 = vmatprep.subr.mxu0 0.0
      %640 = vmatpush1.msra.mxu0 0.0
      %641 = vmatprep.subr.mxu0 0.0
      %642 = vmatpush1.msra.mxu0 0.0
      %643 = vmatprep.subr.mxu0 0.0
      %644 = vmatpush1.msra.mxu0 0.0
      %645 = vmatprep.subr.mxu0 0.0
      %646 = vmatpush1.msra.mxu0 0.0
      %647 = vmatprep.subr.mxu0 0.0
      %648 = vmatpush1.msra.mxu0 %v620
      %649 = vmatprep.subr.mxu0 0.0
      %650 = vmatpush1.msra.mxu0 %v619
      %651 = vmatprep.subr.mxu0 0.0
      %652 = vmatpush1.msra.mxu0 %v618
      %653 = vmatprep.subr.mxu0 0.0
      %654 = vmatpush1.msra.mxu0 %v617
      %655 = vmatprep.subr.mxu0 0.0
      %656 = vmatpush2.msra.mxu0 0.0
      %657 = vmatprep.subr.mxu0 0.0
      %658 = vmatpush2.msra.mxu0 0.0
      %659 = vmatprep.subr.mxu0 0.0
      %660 = vmatpush2.msra.mxu0 0.0
      %661 = vmatprep.subr.mxu0 0.0
      %662 = vmatpush2.msra.mxu0 0.0
      %663 = vmatprep.subr.mxu0 0.0
      %664 = vmatpush2.msra.mxu0 0.0
      %665 = vmatprep.subr.mxu0 0.0
      %666 = vmatpush2.msra.mxu0 0.0
      %667 = vmatprep.subr.mxu0 0.0
      %668 = vmatpush2.msra.mxu0 0.0
      %669 = vmatprep.subr.mxu0 0.0
      %670 = vmatpush2.msra.mxu0 0.0
      %671 = vmatprep.subr.mxu0 0.0
      %672 = vmatpush2.msra.mxu0 0.0
      %673 = vmatprep.subr.mxu0 0.0
      %674 = vmatpush2.msra.mxu0 0.0
      %675 = vmatprep.subr.mxu0 0.0
      %676 = vmatpush2.msra.mxu0 0.0
      %677 = vmatprep.subr.mxu0 0.0
      %678 = vmatpush2.msra.mxu0 0.0
      %679 = vmatprep.subr.mxu0 0.0
      %680 = vmatpush2.msra.mxu0 0.0
      %681 = vmatprep.subr.mxu0 0.0
      %682 = vmatpush2.msra.mxu0 0.0
      %683 = vmatprep.subr.mxu0 0.0
      %684 = vmatpush2.msra.mxu0 0.0
      %685 = vmatprep.subr.mxu0 0.0
      %686 = vmatpush2.msra.mxu0 0.0
      %687 = vmatprep.mubr.f32.mxu0 0.0
      %688 = vmatmul.mubr.f32.gmra.mxu0 %v621
      %v689 = vpop.f32.mrf.mxu0
      %v690 = vadd.f32 0.0, %v689
      %v691 = vpop.f32.mrf.mxu0
      %692 = vdwg.mxu0
      %v693 = vld [vmem:[%s3] sm:$0xff]
      %v694 = vld [vmem:[%s3 + $0x8] sm:$0xff]
      %v695 = vld [vmem:[%s3 + $0x10] sm:$0xff]
      %v696 = vld [vmem:[%s3 + $0x18] sm:$0xff]
      %v697 = vld [vmem:[%s3 + $0x20] sm:$0xff]
      %v698 = vld [vmem:[%s3 + $0x28] sm:$0xff]
      %v699 = vld [vmem:[%s3 + $0x30] sm:$0xff]
      %v700 = vld [vmem:[%s3 + $0x38] sm:$0xff]
      %v701 = vld [vmem:[%s3 + $0x40] sm:$0xff]
      %v702 = vld [vmem:[%s1] sm:$0xff]
      %v703 = vld [vmem:[%s1 + $0x8] sm:$0xff]
      %v704 = vld [vmem:[%s1 + $0x10] sm:$0xff]
      %v705 = vld [vmem:[%s1 + $0x18] sm:$0xff]
      %v706 = vld [vmem:[%s1 + $0x20] sm:$0xff]
      %v707 = vld [vmem:[%s1 + $0x28] sm:$0xff]
      %v708 = vld [vmem:[%s1 + $0x30] sm:$0xff]
      %v709 = vld [vmem:[%s1 + $0x38] sm:$0xff]
      %v710 = vld [vmem:[%s1 + $0x40] sm:$0xff]
      %vm711 = vcmask 15360
      %v713 = vsel %vm711, %v693, 0
      %v716 = vsel %vm711, %v694, 0
      %v719 = vsel %vm711, %v695, 0
      %v722 = vsel %vm711, %v696, 0
      %v725 = vsel %vm711, %v697, 0
      %v728 = vsel %vm711, %v698, 0
      %v731 = vsel %vm711, %v699, 0
      %v734 = vsel %vm711, %v700, 0
      %v737 = vsel %vm711, %v701, 0
      %vm739 = vcmask 1041408
      %v741 = vsel %vm739, %v690, 0
      %743 = vmatprep.subr.mxu0 0.0
      %744 = vmatpush1.msra.mxu0 0.0
      %745 = vmatprep.subr.mxu0 0.0
      %746 = vmatpush1.msra.mxu0 0.0
      %747 = vmatprep.subr.mxu0 0.0
      %748 = vmatpush1.msra.mxu0 0.0
      %749 = vmatprep.subr.mxu0 0.0
      %750 = vmatpush1.msra.mxu0 0.0
      %751 = vmatprep.subr.mxu0 0.0
      %752 = vmatpush1.msra.mxu0 0.0
      %753 = vmatprep.subr.mxu0 0.0
      %754 = vmatpush1.msra.mxu0 0.0
      %755 = vmatprep.subr.mxu0 0.0
      %756 = vmatpush1.msra.mxu0 0.0
      %757 = vmatprep.subr.mxu0 0.0
      %758 = vmatpush1.msra.mxu0 0.0
      %759 = vmatprep.subr.mxu0 0.0
      %760 = vmatpush1.msra.mxu0 0.0
      %761 = vmatprep.subr.mxu0 0.0
      %762 = vmatpush1.msra.mxu0 0.0
      %763 = vmatprep.subr.mxu0 0.0
      %764 = vmatpush1.msra.mxu0 0.0
      %765 = vmatprep.subr.mxu0 0.0
      %766 = vmatpush1.msra.mxu0 0.0
      %767 = vmatprep.subr.mxu0 0.0
      %768 = vmatpush1.msra.mxu0 0.0
      %769 = vmatprep.subr.mxu0 0.0
      %770 = vmatpush1.msra.mxu0 0.0
      %771 = vmatprep.subr.mxu0 0.0
      %772 = vmatpush1.msra.mxu0 0.0
      %773 = vmatprep.subr.mxu0 0.0
      %774 = vmatpush1.msra.mxu0 %v741
      %775 = vmatprep.subr.mxu0 0.0
      %776 = vmatpush2.msra.mxu0 0.0
      %777 = vmatprep.subr.mxu0 0.0
      %778 = vmatpush2.msra.mxu0 0.0
      %779 = vmatprep.subr.mxu0 0.0
      %780 = vmatpush2.msra.mxu0 0.0
      %781 = vmatprep.subr.mxu0 0.0
      %782 = vmatpush2.msra.mxu0 0.0
      %783 = vmatprep.subr.mxu0 0.0
      %784 = vmatpush2.msra.mxu0 0.0
      %785 = vmatprep.subr.mxu0 0.0
      %786 = vmatpush2.msra.mxu0 0.0
      %787 = vmatprep.subr.mxu0 0.0
      %788 = vmatpush2.msra.mxu0 0.0
      %789 = vmatprep.subr.mxu0 0.0
      %790 = vmatpush2.msra.mxu0 0.0
      %791 = vmatprep.subr.mxu0 0.0
      %792 = vmatpush2.msra.mxu0 0.0
      %793 = vmatprep.subr.mxu0 0.0
      %794 = vmatpush2.msra.mxu0 0.0
      %795 = vmatprep.subr.mxu0 0.0
      %796 = vmatpush2.msra.mxu0 0.0
      %797 = vmatprep.subr.mxu0 0.0
      %798 = vmatpush2.msra.mxu0 0.0
      %799 = vmatprep.subr.mxu0 0.0
      %800 = vmatpush2.msra.mxu0 0.0
      %801 = vmatprep.subr.mxu0 0.0
      %802 = vmatpush2.msra.mxu0 0.0
      %803 = vmatprep.subr.mxu0 0.0
      %804 = vmatpush2.msra.mxu0 0.0
      %805 = vmatprep.subr.mxu0 0.0
      %806 = vmatpush2.msra.mxu0 0.0
      %807 = vmatprep.mubr.f32.mxu0 0.0
      %808 = vmatmul.mubr.f32.gmra.mxu0 %v713
      %v809 = vpop.f32.mrf.mxu0
      %v810 = vadd.f32 %v702, %v809
      %v811 = vpop.f32.mrf.mxu0
      %812 = vmatprep.mubr.f32.mxu0 0.0
      %813 = vmatmul.mubr.f32.gmra.mxu0 %v716
      %v814 = vpop.f32.mrf.mxu0
      %v815 = vadd.f32 %v703, %v814
      %v816 = vpop.f32.mrf.mxu0
      %817 = vmatprep.mubr.f32.mxu0 0.0
      %818 = vmatmul.mubr.f32.gmra.mxu0 %v719
      %v819 = vpop.f32.mrf.mxu0
      %v820 = vadd.f32 %v704, %v819
      %v821 = vpop.f32.mrf.mxu0
      %822 = vmatprep.mubr.f32.mxu0 0.0
      %823 = vmatmul.mubr.f32.gmra.mxu0 %v722
      %v824 = vpop.f32.mrf.mxu0
      %v825 = vadd.f32 %v705, %v824
      %v826 = vpop.f32.mrf.mxu0
      %827 = vmatprep.mubr.f32.mxu0 0.0
      %828 = vmatmul.mubr.f32.gmra.mxu0 %v725
      %v829 = vpop.f32.mrf.mxu0
      %v830 = vadd.f32 %v706, %v829
      %v831 = vpop.f32.mrf.mxu0
      %832 = vmatprep.mubr.f32.mxu0 0.0
      %833 = vmatmul.mubr.f32.gmra.mxu0 %v728
      %v834 = vpop.f32.mrf.mxu0
      %v835 = vadd.f32 %v707, %v834
      %v836 = vpop.f32.mrf.mxu0
      %837 = vmatprep.mubr.f32.mxu0 0.0
      %838 = vmatmul.mubr.f32.gmra.mxu0 %v731
      %v839 = vpop.f32.mrf.mxu0
      %v840 = vadd.f32 %v708, %v839
      %v841 = vpop.f32.mrf.mxu0
      %842 = vmatprep.mubr.f32.mxu0 0.0
      %843 = vmatmul.mubr.f32.gmra.mxu0 %v734
      %v844 = vpop.f32.mrf.mxu0
      %v845 = vadd.f32 %v709, %v844
      %v846 = vpop.f32.mrf.mxu0
      %847 = vmatprep.mubr.f32.mxu0 0.0
      %848 = vmatmul.mubr.f32.gmra.mxu0 %v737
      %v849 = vpop.f32.mrf.mxu0
      %v850 = vadd.f32 %v710, %v849
      %v851 = vpop.f32.mrf.mxu0
      %852 = vdwg.mxu0
      %v853 = vtanh.pop %v810
      %v854 = vtanh.pop %v815
      %v855 = vtanh.pop %v820
      %v856 = vtanh.pop %v825
      %v857 = vtanh.pop %v830
      %v858 = vtanh.pop %v835
      %v859 = vtanh.pop %v840
      %v860 = vtanh.pop %v845
      %v861 = vtanh.pop %v850
      %v862 = vld [vmem:[%s7] sm:$0xff]
      %v863 = vld [vmem:[%s7 + $0x8] sm:$0xff]
      %v864 = vld [vmem:[%s7 + $0x10] sm:$0xff]
      %v865 = vld [vmem:[%s7 + $0x18] sm:$0xff]
      %v867 = vsel %vm487, %v853, 0
      %v870 = vsel %vm487, %v854, 0
      %v873 = vsel %vm487, %v855, 0
      %v876 = vsel %vm487, %v856, 0
      %v879 = vsel %vm487, %v857, 0
      %v882 = vsel %vm487, %v858, 0
      %v885 = vsel %vm487, %v859, 0
      %v888 = vsel %vm487, %v860, 0
      %v891 = vsel %vm487, %v861, 0
      %893 = vmatprep.subr.mxu0 0.0
      %894 = vmatpush1.msra.mxu0 0.0
      %895 = vmatprep.subr.mxu0 0.0
      %896 = vmatpush1.msra.mxu0 0.0
      %897 = vmatprep.subr.mxu0 0.0
      %898 = vmatpush1.msra.mxu0 0.0
      %899 = vmatprep.subr.mxu0 0.0
      %900 = vmatpush1.msra.mxu0 0.0
      %901 = vmatprep.subr.mxu0 0.0
      %902 = vmatpush1.msra.mxu0 0.0
      %903 = vmatprep.subr.mxu0 0.0
      %904 = vmatpush1.msra.mxu0 0.0
      %905 = vmatprep.subr.mxu0 0.0
      %906 = vmatpush1.msra.mxu0 0.0
      %907 = vmatprep.subr.mxu0 0.0
      %908 = vmatpush1.msra.mxu0 0.0
      %909 = vmatprep.subr.mxu0 0.0
      %910 = vmatpush1.msra.mxu0 0.0
      %911 = vmatprep.subr.mxu0 0.0
      %912 = vmatpush1.msra.mxu0 0.0
      %913 = vmatprep.subr.mxu0 0.0
      %914 = vmatpush1.msra.mxu0 0.0
      %915 = vmatprep.subr.mxu0 0.0
      %916 = vmatpush1.msra.mxu0 0.0
      %917 = vmatprep.subr.mxu0 0.0
      %918 = vmatpush1.msra.mxu0 %v865
      %919 = vmatprep.subr.mxu0 0.0
      %920 = vmatpush1.msra.mxu0 %v864
      %921 = vmatprep.subr.mxu0 0.0
      %922 = vmatpush1.msra.mxu0 %v863
      %923 = vmatprep.subr.mxu0 0.0
      %924 = vmatpush1.msra.mxu0 %v862
      %925 = vmatprep.subr.mxu0 0.0
      %926 = vmatpush2.msra.mxu0 0.0
      %927 = vmatprep.subr.mxu0 0.0
      %928 = vmatpush2.msra.mxu0 0.0
      %929 = vmatprep.subr.mxu0 0.0
      %930 = vmatpush2.msra.mxu0 0.0
      %931 = vmatprep.subr.mxu0 0.0
      %932 = vmatpush2.msra.mxu0 0.0
      %933 = vmatprep.subr.mxu0 0.0
      %934 = vmatpush2.msra.mxu0 0.0
      %935 = vmatprep.subr.mxu0 0.0
      %936 = vmatpush2.msra.mxu0 0.0
      %937 = vmatprep.subr.mxu0 0.0
      %938 = vmatpush2.msra.mxu0 0.0
      %939 = vmatprep.subr.mxu0 0.0
      %940 = vmatpush2.msra.mxu0 0.0
      %941 = vmatprep.subr.mxu0 0.0
      %942 = vmatpush2.msra.mxu0 0.0
      %943 = vmatprep.subr.mxu0 0.0
      %944 = vmatpush2.msra.mxu0 0.0
      %945 = vmatprep.subr.mxu0 0.0
      %946 = vmatpush2.msra.mxu0 0.0
      %947 = vmatprep.subr.mxu0 0.0
      %948 = vmatpush2.msra.mxu0 0.0
      %949 = vmatprep.subr.mxu0 0.0
      %950 = vmatpush2.msra.mxu0 0.0
      %951 = vmatprep.subr.mxu0 0.0
      %952 = vmatpush2.msra.mxu0 0.0
      %953 = vmatprep.subr.mxu0 0.0
      %954 = vmatpush2.msra.mxu0 0.0
      %955 = vmatprep.subr.mxu0 0.0
      %956 = vmatpush2.msra.mxu0 0.0
      %957 = vmatprep.mubr.f32.mxu0 0.0
      %958 = vmatmul.mubr.f32.gmra.mxu0 %v867
      %v959 = vpop.f32.mrf.mxu0
      %v960 = vadd.f32 0.0, %v959
      %v961 = vpop.f32.mrf.mxu0
      %962 = vmatprep.mubr.f32.mxu0 0.0
      %963 = vmatmul.mubr.f32.gmra.mxu0 %v870
      %v964 = vpop.f32.mrf.mxu0
      %v965 = vadd.f32 0.0, %v964
      %v966 = vpop.f32.mrf.mxu0
      %967 = vmatprep.mubr.f32.mxu0 0.0
      %968 = vmatmul.mubr.f32.gmra.mxu0 %v873
      %v969 = vpop.f32.mrf.mxu0
      %v970 = vadd.f32 0.0, %v969
      %v971 = vpop.f32.mrf.mxu0
      %972 = vmatprep.mubr.f32.mxu0 0.0
      %973 = vmatmul.mubr.f32.gmra.mxu0 %v876
      %v974 = vpop.f32.mrf.mxu0
      %v975 = vadd.f32 0.0, %v974
      %v976 = vpop.f32.mrf.mxu0
      %977 = vmatprep.mubr.f32.mxu0 0.0
      %978 = vmatmul.mubr.f32.gmra.mxu0 %v879
      %v979 = vpop.f32.mrf.mxu0
      %v980 = vadd.f32 0.0, %v979
      %v981 = vpop.f32.mrf.mxu0
      %982 = vmatprep.mubr.f32.mxu0 0.0
      %983 = vmatmul.mubr.f32.gmra.mxu0 %v882
      %v984 = vpop.f32.mrf.mxu0
      %v985 = vadd.f32 0.0, %v984
      %v986 = vpop.f32.mrf.mxu0
      %987 = vmatprep.mubr.f32.mxu0 0.0
      %988 = vmatmul.mubr.f32.gmra.mxu0 %v885
      %v989 = vpop.f32.mrf.mxu0
      %v990 = vadd.f32 0.0, %v989
      %v991 = vpop.f32.mrf.mxu0
      %992 = vmatprep.mubr.f32.mxu0 0.0
      %993 = vmatmul.mubr.f32.gmra.mxu0 %v888
      %v994 = vpop.f32.mrf.mxu0
      %v995 = vadd.f32 0.0, %v994
      %v996 = vpop.f32.mrf.mxu0
      %997 = vmatprep.mubr.f32.mxu0 0.0
      %998 = vmatmul.mubr.f32.gmra.mxu0 %v891
      %v999 = vpop.f32.mrf.mxu0
      %v1000 = vadd.f32 0.0, %v999
      %v1001 = vpop.f32.mrf.mxu0
      %1002 = vdwg.mxu0
      %vm1003 = vcmask 7168
      %v1004 = vsel %vm1003, %v960, -inf
      %v1005 = vsel %vm1003, %v965, -inf
      %v1006 = vsel %vm1003, %v970, -inf
      %v1007 = vsel %vm1003, %v975, -inf
      %v1008 = vsel %vm1003, %v980, -inf
      %v1009 = vmax.f32 %v1004, %v1008
      %v1010 = vsel %vm1003, %v985, -inf
      %v1011 = vmax.f32 %v1005, %v1010
      %v1012 = vsel %vm1003, %v990, -inf
      %v1013 = vmax.f32 %v1006, %v1012
      %v1014 = vsel %vm1003, %v995, -inf
      %v1015 = vmax.f32 %v1007, %v1014
      %v1016 = vsel %vm1003, %v1000, -inf
      %v1017 = vmax.f32 %v1009, %v1016
      %v1018 = vmax.f32 %v1017, %v1011
      %v1019 = vmax.f32 %v1013, %v1015
      %v1020 = vmax.f32 %v1018, %v1019
      %1021 = vmax.xlane.f32.xlu0 %v1020
      %v1022 = vpop.xlane.xlu0 %1021
      %v1023 = vrot.slane %v1022, 4
      %v1024 = vmax.f32 %v1022, %v1023
      %v1025 = vrot.slane %v1024, 2
      %v1026 = vmax.f32 %v1024, %v1025
      %v1027 = vrot.slane %v1026, 1
      %v1028 = vmax.f32 %v1026, %v1027
      %s1029 = vtos %v1028
      %v1030 = vstv %s1029
      %v1031 = vsub.f32 %v960, %v1030
      %v1032 = vsub.f32 %v965, %v1030
      %v1033 = vsub.f32 %v970, %v1030
      %v1034 = vsub.f32 %v975, %v1030
      %v1035 = vsub.f32 %v980, %v1030
      %v1036 = vsub.f32 %v985, %v1030
      %v1037 = vsub.f32 %v990, %v1030
      %v1038 = vsub.f32 %v995, %v1030
      %v1039 = vsub.f32 %v1000, %v1030
      %v1040 = vmul.f32 %v1031, 1.442695
      %v1041 = vpow.pop %v1040
      %v1042 = vmul.f32 %v1032, 1.442695
      %v1043 = vpow.pop %v1042
      %v1044 = vmul.f32 %v1033, 1.442695
      %v1045 = vpow.pop %v1044
      %v1046 = vmul.f32 %v1034, 1.442695
      %v1047 = vpow.pop %v1046
      %v1048 = vmul.f32 %v1035, 1.442695
      %v1049 = vpow.pop %v1048
      %v1050 = vmul.f32 %v1036, 1.442695
      %v1051 = vpow.pop %v1050
      %v1052 = vmul.f32 %v1037, 1.442695
      %v1053 = vpow.pop %v1052
      %v1054 = vmul.f32 %v1038, 1.442695
      %v1055 = vpow.pop %v1054
      %v1056 = vmul.f32 %v1039, 1.442695
      %v1057 = vpow.pop %v1056
      %v1058 = vsel %vm1003, %v1041, 0.0
      %v1059 = vsel %vm1003, %v1043, 0.0
      %v1060 = vadd.f32 %v1058, %v1059
      %v1061 = vsel %vm1003, %v1045, 0.0
      %v1062 = vadd.f32 %v1060, %v1061
      %v1063 = vsel %vm1003, %v1047, 0.0
      %v1064 = vadd.f32 %v1062, %v1063
      %v1065 = vsel %vm1003, %v1049, 0.0
      %v1066 = vadd.f32 %v1064, %v1065
      %v1067 = vsel %vm1003, %v1051, 0.0
      %v1068 = vadd.f32 %v1066, %v1067
      %v1069 = vsel %vm1003, %v1053, 0.0
      %v1070 = vadd.f32 %v1068, %v1069
      %v1071 = vsel %vm1003, %v1055, 0.0
      %v1072 = vadd.f32 %v1070, %v1071
      %v1073 = vsel %vm1003, %v1057, 0.0
      %v1074 = vadd.f32 %v1072, %v1073
      %1075 = vadd.xlane.f32.xlu0 %v1074
      %v1076 = vpop.xlane.xlu0 %1075
      %v1077 = vrot.slane %v1076, 4
      %v1078 = vadd.f32 %v1076, %v1077
      %v1079 = vrot.slane %v1078, 2
      %v1080 = vadd.f32 %v1078, %v1079
      %v1081 = vrot.slane %v1080, 1
      %v1082 = vadd.f32 %v1080, %v1081
      %s1083 = vtos %v1082
      %v1084 = vstv %s1083
      %v1085 = vrcp.pop %v1084
      %v1086 = vmul.f32 %v1041, %v1085
      %v1087 = vmul.f32 %v1043, %v1085
      %v1088 = vmul.f32 %v1045, %v1085
      %v1089 = vmul.f32 %v1047, %v1085
      %v1090 = vmul.f32 %v1049, %v1085
      %v1091 = vmul.f32 %v1051, %v1085
      %v1092 = vmul.f32 %v1053, %v1085
      %v1093 = vmul.f32 %v1055, %v1085
      %v1094 = vmul.f32 %v1057, %v1085
      %v1095 = vld [vmem:[%s2] sm:$0xff]
      %v1096 = vld [vmem:[%s2 + $0x8] sm:$0xff]
      %v1097 = vld [vmem:[%s2 + $0x10] sm:$0xff]
      %v1098 = vld [vmem:[%s2 + $0x18] sm:$0xff]
      %v1099 = vld [vmem:[%s2 + $0x20] sm:$0xff]
      %v1100 = vld [vmem:[%s2 + $0x28] sm:$0xff]
      %v1101 = vld [vmem:[%s2 + $0x30] sm:$0xff]
      %v1102 = vld [vmem:[%s2 + $0x38] sm:$0xff]
      %v1103 = vld [vmem:[%s2 + $0x40] sm:$0xff]
      %1105 = vset.pattern.permute.xlu0 0
      %1106 = vperm.xlu0 %1105, %v1086
      %v1107 = vpop.permute.xlu0 %1106
      %1110 = vset.pattern.permute.xlu0 0
      %1111 = vperm.xlu0 %1110, %v1087
      %v1112 = vpop.permute.xlu0 %1111
      %1115 = vset.pattern.permute.xlu0 0
      %1116 = vperm.xlu0 %1115, %v1088
      %v1117 = vpop.permute.xlu0 %1116
      %1120 = vset.pattern.permute.xlu0 0
      %1121 = vperm.xlu0 %1120, %v1089
      %v1122 = vpop.permute.xlu0 %1121
      %1125 = vset.pattern.permute.xlu0 0
      %1126 = vperm.xlu0 %1125, %v1090
      %v1127 = vpop.permute.xlu0 %1126
      %1130 = vset.pattern.permute.xlu0 0
      %1131 = vperm.xlu0 %1130, %v1091
      %v1132 = vpop.permute.xlu0 %1131
      %1135 = vset.pattern.permute.xlu0 0
      %1136 = vperm.xlu0 %1135, %v1092
      %v1137 = vpop.permute.xlu0 %1136
      %1140 = vset.pattern.permute.xlu0 0
      %1141 = vperm.xlu0 %1140, %v1093
      %v1142 = vpop.permute.xlu0 %1141
      %1145 = vset.pattern.permute.xlu0 0
      %1146 = vperm.xlu0 %1145, %v1094
      %v1147 = vpop.permute.xlu0 %1146
      %v1149 = vmul.f32 %v1107, %v1095
      %v1150 = vmul.f32 %v1112, %v1096
      %v1151 = vmul.f32 %v1117, %v1097
      %v1152 = vmul.f32 %v1122, %v1098
      %v1153 = vmul.f32 %v1127, %v1099
      %v1154 = vmul.f32 %v1132, %v1100
      %v1155 = vmul.f32 %v1137, %v1101
      %v1156 = vmul.f32 %v1142, %v1102
      %v1157 = vmul.f32 %v1147, %v1103
      %v1158 = vsel %vm504, %v1149, 0.0
      %v1159 = vsel %vm504, %v1150, 0.0
      %v1160 = vadd.f32 %v1158, %v1159
      %v1161 = vsel %vm504, %v1151, 0.0
      %v1162 = vadd.f32 %v1160, %v1161
      %v1163 = vsel %vm504, %v1152, 0.0
      %v1164 = vadd.f32 %v1162, %v1163
      %v1165 = vsel %vm504, %v1153, 0.0
      %v1166 = vadd.f32 %v1164, %v1165
      %v1167 = vsel %vm504, %v1154, 0.0
      %v1168 = vadd.f32 %v1166, %v1167
      %v1169 = vsel %vm504, %v1155, 0.0
      %v1170 = vadd.f32 %v1168, %v1169
      %v1171 = vsel %vm504, %v1156, 0.0
      %v1172 = vadd.f32 %v1170, %v1171
      %v1173 = vsel %vm504, %v1157, 0.0
      %v1174 = vadd.f32 %v1172, %v1173
      %v1175 = vrot.slane %v1174, 4
      %v1176 = vadd.f32 %v1174, %v1175
      %v1177 = vrot.slane %v1176, 2
      %v1178 = vadd.f32 %v1176, %v1177
      %v1179 = vrot.slane %v1178, 1
      %v1180 = vadd.f32 %v1178, %v1179
      %v1181 = vld [vmem:[%s8] sm:$0xff]
      %v1182 = vld [vmem:[%s8 + $0x8] sm:$0xff]
      %v1183 = vld [vmem:[%s8 + $0x10] sm:$0xff]
      %v1184 = vld [vmem:[%s8 + $0x18] sm:$0xff]
      %v1185 = vld [vmem:[%s8 + $0x20] sm:$0xff]
      %v1186 = vld [vmem:[%s8 + $0x28] sm:$0xff]
      %v1187 = vld [vmem:[%s8 + $0x30] sm:$0xff]
      %v1188 = vld [vmem:[%s8 + $0x38] sm:$0xff]
      %v1189 = vld [vmem:[%s9] sm:$0x1]
      %v1191 = vsel %vm504, %v1180, 0
      %1193 = vmatprep.subr.mxu0 0.0
      %1194 = vmatpush1.msra.mxu0 0.0
      %1195 = vmatprep.subr.mxu0 0.0
      %1196 = vmatpush1.msra.mxu0 0.0
      %1197 = vmatprep.subr.mxu0 0.0
      %1198 = vmatpush1.msra.mxu0 0.0
      %1199 = vmatprep.subr.mxu0 0.0
      %1200 = vmatpush1.msra.mxu0 0.0
      %1201 = vmatprep.subr.mxu0 0.0
      %1202 = vmatpush1.msra.mxu0 0.0
      %1203 = vmatprep.subr.mxu0 0.0
      %1204 = vmatpush1.msra.mxu0 0.0
      %1205 = vmatprep.subr.mxu0 0.0
      %1206 = vmatpush1.msra.mxu0 0.0
      %1207 = vmatprep.subr.mxu0 0.0
      %1208 = vmatpush1.msra.mxu0 0.0
      %1209 = vmatprep.subr.mxu0 0.0
      %1210 = vmatpush1.msra.mxu0 %v1188
      %1211 = vmatprep.subr.mxu0 0.0
      %1212 = vmatpush1.msra.mxu0 %v1187
      %1213 = vmatprep.subr.mxu0 0.0
      %1214 = vmatpush1.msra.mxu0 %v1186
      %1215 = vmatprep.subr.mxu0 0.0
      %1216 = vmatpush1.msra.mxu0 %v1185
      %1217 = vmatprep.subr.mxu0 0.0
      %1218 = vmatpush1.msra.mxu0 %v1184
      %1219 = vmatprep.subr.mxu0 0.0
      %1220 = vmatpush1.msra.mxu0 %v1183
      %1221 = vmatprep.subr.mxu0 0.0
      %1222 = vmatpush1.msra.mxu0 %v1182
      %1223 = vmatprep.subr.mxu0 0.0
      %1224 = vmatpush1.msra.mxu0 %v1181
      %1225 = vmatprep.subr.mxu0 0.0
      %1226 = vmatpush2.msra.mxu0 0.0
      %1227 = vmatprep.subr.mxu0 0.0
      %1228 = vmatpush2.msra.mxu0 0.0
      %1229 = vmatprep.subr.mxu0 0.0
      %1230 = vmatpush2.msra.mxu0 0.0
      %1231 = vmatprep.subr.mxu0 0.0
      %1232 = vmatpush2.msra.mxu0 0.0
      %1233 = vmatprep.subr.mxu0 0.0
      %1234 = vmatpush2.msra.mxu0 0.0
      %1235 = vmatprep.subr.mxu0 0.0
      %1236 = vmatpush2.msra.mxu0 0.0
      %1237 = vmatprep.subr.mxu0 0.0
      %1238 = vmatpush2.msra.mxu0 0.0
      %1239 = vmatprep.subr.mxu0 0.0
      %1240 = vmatpush2.msra.mxu0 0.0
      %1241 = vmatprep.subr.mxu0 0.0
      %1242 = vmatpush2.msra.mxu0 0.0
      %1243 = vmatprep.subr.mxu0 0.0
      %1244 = vmatpush2.msra.mxu0 0.0
      %1245 = vmatprep.subr.mxu0 0.0
      %1246 = vmatpush2.msra.mxu0 0.0
      %1247 = vmatprep.subr.mxu0 0.0
      %1248 = vmatpush2.msra.mxu0 0.0
      %1249 = vmatprep.subr.mxu0 0.0
      %1250 = vmatpush2.msra.mxu0 0.0
      %1251 = vmatprep.subr.mxu0 0.0
      %1252 = vmatpush2.msra.mxu0 0.0
      %1253 = vmatprep.subr.mxu0 0.0
      %1254 = vmatpush2.msra.mxu0 0.0
      %1255 = vmatprep.subr.mxu0 0.0
      %1256 = vmatpush2.msra.mxu0 0.0
      %1257 = vmatprep.mubr.f32.mxu0 0.0
      %1258 = vmatmul.mubr.f32.gmra.mxu0 %v1191
      %v1259 = vpop.f32.mrf.mxu0
      %v1260 = vadd.f32 %v1189, %v1259
      %v1261 = vpop.f32.mrf.mxu0
      %1262 = vdwg.mxu0
      %v1263 = vld [vmem:[%s10] sm:$0xff]
      %v1264 = vld [vmem:[%s10 + $0x8] sm:$0xff]
      %v1265 = vld [vmem:[%s10 + $0x10] sm:$0xff]
      %v1266 = vld [vmem:[%s10 + $0x18] sm:$0xff]
      %v1267 = vld [vmem:[%s10 + $0x20] sm:$0xff]
      %v1268 = vld [vmem:[%s10 + $0x28] sm:$0xff]
      %v1269 = vld [vmem:[%s10 + $0x30] sm:$0xff]
      %v1270 = vld [vmem:[%s10 + $0x38] sm:$0xff]
      %v1271 = vld [vmem:[%s11] sm:$0x1]
      %1272 = vmatprep.subr.mxu0 0.0
      %1273 = vmatpush1.msra.mxu0 0.0
      %1274 = vmatprep.subr.mxu0 0.0
      %1275 = vmatpush1.msra.mxu0 0.0
      %1276 = vmatprep.subr.mxu0 0.0
      %1277 = vmatpush1.msra.mxu0 0.0
      %1278 = vmatprep.subr.mxu0 0.0
      %1279 = vmatpush1.msra.mxu0 0.0
      %1280 = vmatprep.subr.mxu0 0.0
      %1281 = vmatpush1.msra.mxu0 0.0
      %1282 = vmatprep.subr.mxu0 0.0
      %1283 = vmatpush1.msra.mxu0 0.0
      %1284 = vmatprep.subr.mxu0 0.0
      %1285 = vmatpush1.msra.mxu0 0.0
      %1286 = vmatprep.subr.mxu0 0.0
      %1287 = vmatpush1.msra.mxu0 0.0
      %1288 = vmatprep.subr.mxu0 0.0
      %1289 = vmatpush1.msra.mxu0 %v1270
      %1290 = vmatprep.subr.mxu0 0.0
      %1291 = vmatpush1.msra.mxu0 %v1269
      %1292 = vmatprep.subr.mxu0 0.0
      %1293 = vmatpush1.msra.mxu0 %v1268
      %1294 = vmatprep.subr.mxu0 0.0
      %1295 = vmatpush1.msra.mxu0 %v1267
      %1296 = vmatprep.subr.mxu0 0.0
      %1297 = vmatpush1.msra.mxu0 %v1266
      %1298 = vmatprep.subr.mxu0 0.0
      %1299 = vmatpush1.msra.mxu0 %v1265
      %1300 = vmatprep.subr.mxu0 0.0
      %1301 = vmatpush1.msra.mxu0 %v1264
      %1302 = vmatprep.subr.mxu0 0.0
      %1303 = vmatpush1.msra.mxu0 %v1263
      %1304 = vmatprep.subr.mxu0 0.0
      %1305 = vmatpush2.msra.mxu0 0.0
      %1306 = vmatprep.subr.mxu0 0.0
      %1307 = vmatpush2.msra.mxu0 0.0
      %1308 = vmatprep.subr.mxu0 0.0
      %1309 = vmatpush2.msra.mxu0 0.0
      %1310 = vmatprep.subr.mxu0 0.0
      %1311 = vmatpush2.msra.mxu0 0.0
      %1312 = vmatprep.subr.mxu0 0.0
      %1313 = vmatpush2.msra.mxu0 0.0
      %1314 = vmatprep.subr.mxu0 0.0
      %1315 = vmatpush2.msra.mxu0 0.0
      %1316 = vmatprep.subr.mxu0 0.0
      %1317 = vmatpush2.msra.mxu0 0.0
      %1318 = vmatprep.subr.mxu0 0.0
      %1319 = vmatpush2.msra.mxu0 0.0
      %1320 = vmatprep.subr.mxu0 0.0
      %1321 = vmatpush2.msra.mxu0 0.0
      %1322 = vmatprep.subr.mxu0 0.0
      %1323 = vmatpush2.msra.mxu0 0.0
      %1324 = vmatprep.subr.mxu0 0.0
      %1325 = vmatpush2.msra.mxu0 0.0
      %1326 = vmatprep.subr.mxu0 0.0
      %1327 = vmatpush2.msra.mxu0 0.0
      %1328 = vmatprep.subr.mxu0 0.0
      %1329 = vmatpush2.msra.mxu0 0.0
      %1330 = vmatprep.subr.mxu0 0.0
      %1331 = vmatpush2.msra.mxu0 0.0
      %1332 = vmatprep.subr.mxu0 0.0
      %1333 = vmatpush2.msra.mxu0 0.0
      %1334 = vmatprep.subr.mxu0 0.0
      %1335 = vmatpush2.msra.mxu0 0.0
      %1336 = vmatprep.mubr.f32.mxu0 0.0
      %1337 = vmatmul.mubr.f32.gmra.mxu0 %v1191
      %v1338 = vpop.f32.mrf.mxu0
      %v1339 = vadd.f32 %v1271, %v1338
      %v1340 = vpop.f32.mrf.mxu0
      %1341 = vdwg.mxu0
      %v1342 = vld [vmem:[%s12] sm:$0xff]
      %v1343 = vld [vmem:[%s12 + $0x8] sm:$0xff]
      %v1344 = vld [vmem:[%s12 + $0x10] sm:$0xff]
      %v1345 = vld [vmem:[%s12 + $0x18] sm:$0xff]
      %v1346 = vld [vmem:[%s13] sm:$0x1]
      %v1348 = vlaneseq
      %v1349 = vshrl.u32 %v1348, 7
      %v1350 = vsub.s32 0, %v1349
      %v1351 = vrot.slane %v1346, %v1350
      %1353 = vmatprep.subr.mxu0 0.0
      %1354 = vmatpush1.msra.mxu0 0.0
      %1355 = vmatprep.subr.mxu0 0.0
      %1356 = vmatpush1.msra.mxu0 0.0
      %1357 = vmatprep.subr.mxu0 0.0
      %1358 = vmatpush1.msra.mxu0 0.0
      %1359 = vmatprep.subr.mxu0 0.0
      %1360 = vmatpush1.msra.mxu0 0.0
      %1361 = vmatprep.subr.mxu0 0.0
      %1362 = vmatpush1.msra.mxu0 0.0
      %1363 = vmatprep.subr.mxu0 0.0
      %1364 = vmatpush1.msra.mxu0 0.0
      %1365 = vmatprep.subr.mxu0 0.0
      %1366 = vmatpush1.msra.mxu0 0.0
      %1367 = vmatprep.subr.mxu0 0.0
      %1368 = vmatpush1.msra.mxu0 0.0
      %1369 = vmatprep.subr.mxu0 0.0
      %1370 = vmatpush1.msra.mxu0 0.0
      %1371 = vmatprep.subr.mxu0 0.0
      %1372 = vmatpush1.msra.mxu0 0.0
      %1373 = vmatprep.subr.mxu0 0.0
      %1374 = vmatpush1.msra.mxu0 0.0
      %1375 = vmatprep.subr.mxu0 0.0
      %1376 = vmatpush1.msra.mxu0 0.0
      %1377 = vmatprep.subr.mxu0 0.0
      %1378 = vmatpush1.msra.mxu0 %v1345
      %1379 = vmatprep.subr.mxu0 0.0
      %1380 = vmatpush1.msra.mxu0 %v1344
      %1381 = vmatprep.subr.mxu0 0.0
      %1382 = vmatpush1.msra.mxu0 %v1343
      %1383 = vmatprep.subr.mxu0 0.0
      %1384 = vmatpush1.msra.mxu0 %v1342
      %1385 = vmatprep.subr.mxu0 0.0
      %1386 = vmatpush2.msra.mxu0 0.0
      %1387 = vmatprep.subr.mxu0 0.0
      %1388 = vmatpush2.msra.mxu0 0.0
      %1389 = vmatprep.subr.mxu0 0.0
      %1390 = vmatpush2.msra.mxu0 0.0
      %1391 = vmatprep.subr.mxu0 0.0
      %1392 = vmatpush2.msra.mxu0 0.0
      %1393 = vmatprep.subr.mxu0 0.0
      %1394 = vmatpush2.msra.mxu0 0.0
      %1395 = vmatprep.subr.mxu0 0.0
      %1396 = vmatpush2.msra.mxu0 0.0
      %1397 = vmatprep.subr.mxu0 0.0
      %1398 = vmatpush2.msra.mxu0 0.0
      %1399 = vmatprep.subr.mxu0 0.0
      %1400 = vmatpush2.msra.mxu0 0.0
      %1401 = vmatprep.subr.mxu0 0.0
      %1402 = vmatpush2.msra.mxu0 0.0
      %1403 = vmatprep.subr.mxu0 0.0
      %1404 = vmatpush2.msra.mxu0 0.0
      %1405 = vmatprep.subr.mxu0 0.0
      %1406 = vmatpush2.msra.mxu0 0.0
      %1407 = vmatprep.subr.mxu0 0.0
      %1408 = vmatpush2.msra.mxu0 0.0
      %1409 = vmatprep.subr.mxu0 0.0
      %1410 = vmatpush2.msra.mxu0 0.0
      %1411 = vmatprep.subr.mxu0 0.0
      %1412 = vmatpush2.msra.mxu0 0.0
      %1413 = vmatprep.subr.mxu0 0.0
      %1414 = vmatpush2.msra.mxu0 0.0
      %1415 = vmatprep.subr.mxu0 0.0
      %1416 = vmatpush2.msra.mxu0 0.0
      %1417 = vmatprep.mubr.f32.mxu0 0.0
      %1418 = vmatmul.mubr.f32.gmra.mxu0 %v621
      %v1419 = vpop.f32.mrf.mxu0
      %v1420 = vadd.f32 %v1351, %v1419
      %v1421 = vpop.f32.mrf.mxu0
      %1422 = vdwg.mxu0
      %v1423 = vlaneseq
      %v1424 = vshrl.u32 %v1423, 7
      %v1425 = vsub.s32 0, %v1424
      %v1426 = vrot.slane %v1339, %v1425
      %v1427 = vadd.f32 %v1420, %v1426
      %vm1428 = vcmask 253952
      %1429 = vst.msk [vmem:[#allocation4] sm:$0x1] %vm1428, %v1260
      %vm1430 = vcmask 123904
      %v1431 = vsel %vm1430, %v1427, -inf
      %1432 = vmax.xlane.f32.xlu0 %v1431
      %v1433 = vpop.xlane.xlu0 %1432
      %v1434 = vsub.f32 %v1427, %v1433
      %v1435 = vmul.f32 %v1434, 1.442695
      %v1436 = vpow.pop %v1435
      %v1437 = vsel %vm1430, %v1436, 0.0
      %1438 = vadd.xlane.f32.xlu0 %v1437
      %v1439 = vpop.xlane.xlu0 %1438
      %v1440 = vlog2.pop %v1439
      %v1441 = vmul.f32 %v1440, 0.6931472
      %v1442 = vsub.f32 %v1434, %v1441
      %1443 = vst.msk [vmem:[%s462] sm:$0x3] %vm1430, %v1442
      %p1444 = scmp.lt.s32.totalorder %s25, 4
      %s1445 = scalar_select %p1444, %s25, 4
      %s1446 = smul.addr %s1445, 2
      %s1447 = scalar_lea.vmem %s14, %s1446
      // Predicated region
      $region81: #{model_forward.3} parent=75 // pred_check
        %p1448 = pneg %p342
      $region82: #{model_forward.3} parent=75 // pred_check_branch
        %1450 = sbr.rel (%p1448) target = $region84
      $region83: #{model_forward.3} parent=75 // pred_region
        _
      $region84: #{model_forward.3} parent=75 // pred_fallthru
        _
    $region76: #{model_forward.3} parent=5 // pred_fallthru
      _
    %p1451 = scmp.le.s32.totalorder 2, %s20
    // Predicated region
    $region85: #{model_forward.3} parent=5 // pred_check
      %p1452 = pneg %p1451
    $region86: #{model_forward.3} parent=5 // pred_check_branch
      %1454 = sbr.rel (%p1452) target = $region88
    $region87: #{model_forward.3} parent=5 // pred_region
      %s1455 = ssub.s32 %s20, 2
      // Predicated region
      $region89: #{model_forward.3} parent=87 // pred_check
        %p1456 = pneg %p348
      $region90: #{model_forward.3} parent=87 // pred_check_branch
        %1458 = sbr.rel (%p1456) target = $region92
      $region91: #{model_forward.3} parent=87 // pred_region
        %p1459 = scmp.lt.s32.totalorder %s26, 4
        %s1460 = scalar_select %p1459, %s26, 4
        %s1461 = smul.addr %s1460, 2
        %s1462 = scalar_lea.vmem %s14, %s1461
      $region92: #{model_forward.3} parent=87 // pred_fallthru
        _
    $region88: #{model_forward.3} parent=5 // pred_fallthru
      _
  $region6: #{model_forward.3} parent=0 // loop_footer
    %s24 = sadd.s32 1, %s20
  $region7: #{model_forward.3} parent=0 // loop_footer_branch
    %19 = sbr.rel target = $region3
  $region8: #{model_forward.3} parent=0 // loop_exit
    _

</llo_original>
